<compile_context>
chip_gen: v7x
topology: tpu7x:2x2x1
jax: 0.10.0
libtpu: 0.0.40
codegen_flags: <defaults>
</compile_context>

<pallas_src>
import numpy as np
import jax
import jax.numpy as jnp
from jax.experimental import pallas as pl
from jax.experimental.pallas import tpu as pltpu


def build_unet_up(in_size, out_size, N, H, W):
    """Returns forward(x_nchw, params) for the fused UNetUp block."""
    Cin, Cout = in_size, out_size
    CinP = ((Cin + 7) // 8) * 8          # pad channels so every staged window is 8 sublanes
    Hp, Wp = H + 2, W + 2                # 1-px zero border; row stride of flat planes
    L = Hp * Wp                          # per-image flat plane length
    M = N * L                            # valid GEMM width (batch folded into lanes)
    M_pad = ((M + 127) // 128) * 128     # lane-dense GEMM width (multiple of 128)
    BASE = 128                           # 128-aligned data origin inside phase planes
    PTOT = BASE + M_pad + 128            # phase-plane lane extent
    XTOT = M_pad + 128                   # input-plane lane extent (zero tail)
    K1 = 9 * CinP                        # conv-transpose contraction depth
    K2 = 16 * Cout                       # 3x3-conv contraction depth
    EPS, SLOPE = 1e-5, 0.01
    n_valid = float(N * (2 * H) * (2 * W))

    assert Wp + 1 <= BASE, "phase-plane prefix too small for the 3x3 offsets"
    assert 2 * Wp + 2 <= XTOT - M_pad, "input tail too small for the conv-transpose shifts"
    assert BASE + Wp + 1 <= PTOT - M_pad, "phase-plane tail too small for the 3x3 offsets"

    # ---- static tap tables (Python ints baked into the traced code) --------------
    # ConvTranspose2d(4,2,1): output phase (r,s) is a 2x2 conv over the padded input.
    # tap (dh,dw) uses kernel element (3-r-2dh, 3-s-2dw) and the unique shifted
    # window u = (r+dh)*3 + (s+dw) (lane shift (r+dh)*Wp + (s+dw)).
    SHIFTS1 = [(rr, ss) for rr in range(3) for ss in range(3)]       # 9 unique windows
    k1h = np.zeros((4, 9), np.int32)
    k1w = np.zeros((4, 9), np.int32)
    k1v = np.zeros((4, 9), np.float32)
    for r in range(2):
        for s in range(2):
            ph = 2 * r + s
            for dh in range(2):
                for dw in range(2):
                    u = (r + dh) * 3 + (s + dw)
                    k1h[ph, u] = 3 - r - 2 * dh
                    k1w[ph, u] = 3 - s - 2 * dw
                    k1v[ph, u] = 1.0

    # Conv2d(3,3,pad=1), phase-to-phase: output phase (r,s), tap (a,b) reads source
    # phase (r2,s2) at plane offset (da,db).  Only 16 (src, da, db) windows are unique.
    UNIQ2 = []
    u2_index = {}
    for p2 in range(4):
        r2, s2 = divmod(p2, 2)
        for da in ([0, 1] if r2 == 0 else [-1, 0]):
            for db in ([0, 1] if s2 == 0 else [-1, 0]):
                u2_index[(p2, da, db)] = len(UNIQ2)
                UNIQ2.append((p2, da, db))
    k2a = np.zeros((4, 16), np.int32)
    k2b = np.zeros((4, 16), np.int32)
    k2v = np.zeros((4, 16), np.float32)
    for r in range(2):
        for s in range(2):
            ph = 2 * r + s
            for a in range(3):
                for b in range(3):
                    da, r2 = divmod(r + a - 1, 2)
                    db, s2 = divmod(s + b - 1, 2)
                    v = u2_index[(2 * r2 + s2, da, db)]
                    k2a[ph, v] = a
                    k2b[ph, v] = b
                    k2v[ph, v] = 1.0

    # 0/1 mask of GEMM columns that hold a real pixel (i<H, j<W inside each image).
    mask_np = np.zeros((1, M_pad), np.float32)
    for n in range(N):
        for i in range(H):
            mask_np[0, n * L + i * Wp: n * L + i * Wp + W] = 1.0
    mask_const = jnp.asarray(mask_np)

    def kernel(x_ref, mask_ref, w1_ref, bt_ref, w2_ref, bc_ref, g_ref, b_ref,
               o_ref, p_ref, r1_ref, r2_ref):
        mask = mask_ref[...]                                    # (1, M_pad), 0/1

        # ---- stage the 9 unique shifted input windows once (shared by 4 phases) --
        for u, (rr, ss) in enumerate(SHIFTS1):
            r1_ref[pl.ds(u * CinP, CinP), :] = x_ref[:, pl.ds(rr * Wp + ss, M_pad)]

        # ---- ConvTranspose2d(4,2,1): ONE (4*Cout, K1) @ (K1, M_pad) matmul --------
        y1 = jnp.dot(w1_ref[...], r1_ref[...], preferred_element_type=jnp.float32)
        y1 = (y1 + bt_ref[...]) * mask          # bias; zero border / pad columns

        # Phase planes: zero only the two 128-wide aligned border slabs, then one
        # 128-aligned masked data write per phase (mask supplies all interior zeros).
        zpre = jnp.zeros((Cout, BASE), jnp.float32)
        zpost = jnp.zeros((Cout, PTOT - BASE - M_pad), jnp.float32)
        for ph in range(4):
            p_ref[ph, :, pl.ds(0, BASE)] = zpre
            p_ref[ph, :, pl.ds(BASE + M_pad, PTOT - BASE - M_pad)] = zpost
            p_ref[ph, :, pl.ds(BASE, M_pad)] = y1[ph * Cout:(ph + 1) * Cout, :]

        # ---- stage the 16 unique (src-phase, shift) windows of the conv1 planes --
        for v, (p2, da, db) in enumerate(UNIQ2):
            r2_ref[pl.ds(v * Cout, Cout), :] = \
                p_ref[p2, :, pl.ds(BASE + da * Wp + db, M_pad)]

        # ---- Conv2d(out,out,3,1,1): ONE (4*Cout, K2) @ (K2, M_pad) matmul ---------
        y2 = jnp.dot(w2_ref[...], r2_ref[...],
                     preferred_element_type=jnp.float32) + bc_ref[...]

        # ---- BatchNorm (training-mode batch stats) + LeakyReLU, fused epilogue ----
        ym = y2 * mask                          # mask is 0/1 -> reuse for sum & sumsq
        s1 = jnp.sum(ym, axis=1, keepdims=True)               # (4*Cout, 1)
        q1 = jnp.sum(ym * ym, axis=1, keepdims=True)
        ssum = s1[0:Cout] + s1[Cout:2 * Cout] + s1[2 * Cout:3 * Cout] + s1[3 * Cout:]
        ssq = q1[0:Cout] + q1[Cout:2 * Cout] + q1[2 * Cout:3 * Cout] + q1[3 * Cout:]
        mean = ssum * (1.0 / n_valid)
        var = ssq * (1.0 / n_valid) - mean * mean             # biased variance
        scale = g_ref[...] * jax.lax.rsqrt(var + EPS)         # (Cout, 1)
        shift = b_ref[...] - mean * scale
        for ph in range(4):
            yp = y2[ph * Cout:(ph + 1) * Cout, :] * scale + shift
            o_ref[pl.ds(ph * Cout, Cout), :] = jnp.where(yp >= 0.0, yp, SLOPE * yp)

    fused = pl.pallas_call(
        kernel,
        out_shape=jax.ShapeDtypeStruct((4 * Cout, M_pad), jnp.float32),
        scratch_shapes=[pltpu.VMEM((4, Cout, PTOT), jnp.float32),   # conv1 phase planes
                        pltpu.VMEM((K1, M_pad), jnp.float32),       # stacked conv1 RHS
                        pltpu.VMEM((K2, M_pad), jnp.float32)],      # stacked conv2 RHS
    )

    def forward(x_nchw, params):
        x = x_nchw.astype(jnp.float32)
        # 1-px zero border per image, flatten with row stride Wp, fold batch into the
        # lane axis; pad channels to CinP and lanes to XTOT (zero tail keeps every
        # shifted window in-bounds and finite).
        xp = jnp.pad(x, ((0, 0), (0, 0), (1, 1), (1, 1)))       # (N, Cin, Hp, Wp)
        xf = jnp.transpose(xp, (1, 0, 2, 3)).reshape(Cin, M)
        xf = jnp.pad(xf, ((0, CinP - Cin), (0, XTOT - M)))      # (CinP, XTOT)

        # Stacked wide-K weights (zero-filled in unused (phase, window) slots).
        wt = params["wt"]                                       # (Cin, Cout, 4, 4)
        w1 = jnp.transpose(wt[:, :, k1h, k1w] * k1v, (2, 1, 3, 0))    # (4,Cout,9,Cin)
        w1 = jnp.pad(w1, ((0, 0), (0, 0), (0, 0), (0, CinP - Cin)))
        w1 = w1.reshape(4 * Cout, K1)
        wc = params["wc"]                                       # (Cout, Cout, 3, 3)
        w2 = jnp.transpose(wc[:, :, k2a, k2b] * k2v, (2, 0, 3, 1))    # (4,Cout,16,Cout)
        w2 = w2.reshape(4 * Cout, K2)

        bt4 = jnp.tile(params["bt"].reshape(Cout, 1), (4, 1))   # (4*Cout, 1)
        bc4 = jnp.tile(params["bc"].reshape(Cout, 1), (4, 1))

        out = fused(xf, mask_const, w1, bt4, w2, bc4,
                    params["gamma"].reshape(Cout, 1),
                    params["beta"].reshape(Cout, 1))            # (4*Cout, M_pad)

        # (phase, C, N*L) -> (N, C, 2H, 2W): drop pad/junk columns, interleave phases.
        out = out.reshape(4, Cout, M_pad)[:, :, :M]
        out = out.reshape(2, 2, Cout, N, Hp, Wp)[:, :, :, :, :H, :W]
        out = jnp.transpose(out, (3, 2, 4, 0, 5, 1)).reshape(N, Cout, 2 * H, 2 * W)
        return out

    return forward


# ------------------------------ pure-JAX reference ------------------------------

def ref_forward(x_nchw, params):
    x = jnp.transpose(x_nchw, (0, 2, 3, 1)).astype(jnp.float32)
    w_t = jnp.transpose(params["wt"][:, :, ::-1, ::-1], (2, 3, 0, 1))
    y = jax.lax.conv_general_dilated(
        x, w_t, window_strides=(1, 1), padding=((2, 2), (2, 2)),
        lhs_dilation=(2, 2), dimension_numbers=("NHWC", "HWIO", "NHWC"),
        precision=jax.lax.Precision.HIGHEST) + params["bt"]
    w_c = jnp.transpose(params["wc"], (2, 3, 1, 0))
    y = jax.lax.conv_general_dilated(
        y, w_c, window_strides=(1, 1), padding=((1, 1), (1, 1)),
        dimension_numbers=("NHWC", "HWIO", "NHWC"),
        precision=jax.lax.Precision.HIGHEST) + params["bc"]
    mean = jnp.mean(y, axis=(0, 1, 2))
    var = jnp.mean(jnp.square(y - mean), axis=(0, 1, 2))
    y = (y - mean) * jax.lax.rsqrt(var + 1e-5) * params["gamma"] + params["beta"]
    y = jnp.where(y >= 0, y, 0.01 * y)
    return jnp.transpose(y, (0, 3, 1, 2))


# ------------------------------------- main --------------------------------------

if __name__ == "__main__":
    key = jax.random.PRNGKey(0)
    in_size, out_size = 4, 8
    N, H, W = 2, 16, 16

    ks = jax.random.split(key, 7)
    params = {
        # ConvTranspose2d weight: (in, out, 4, 4), bias: (out,)
        "wt": 0.1 * jax.random.normal(ks[0], (in_size, out_size, 4, 4), jnp.float32),
        "bt": 0.1 * jax.random.normal(ks[1], (out_size,), jnp.float32),
        # Conv2d weight: (out, out, 3, 3), bias: (out,)
        "wc": 0.1 * jax.random.normal(ks[2], (out_size, out_size, 3, 3), jnp.float32),
        "bc": 0.1 * jax.random.normal(ks[3], (out_size,), jnp.float32),
        # BatchNorm2d affine params
        "gamma": 1.0 + 0.1 * jax.random.normal(ks[4], (out_size,), jnp.float32),
        "beta": 0.1 * jax.random.normal(ks[5], (out_size,), jnp.float32),
    }
    x = jax.random.normal(ks[6], (N, in_size, H, W), jnp.float32)

    forward = jax.jit(build_unet_up(in_size, out_size, N, H, W))
    out = jax.block_until_ready(forward(x, params))
    assert out.shape == (N, out_size, 2 * H, 2 * W), out.shape

    ref = jax.block_until_ready(ref_forward(x, params))
    err = float(jnp.max(jnp.abs(out - ref)))
    if not np.isfinite(err) or err > 2e-3:
        raise AssertionError(f"mismatch vs reference: max abs err = {err}")

    print("KERNEL_OK")
</pallas_src>

<mosaic_0001>
module attributes {stable_mosaic.version = 11 : i64} {
  func.func @kernel(%arg0: memref<8x896xf32, #tpu.memory_space<vmem>>, %arg1: memref<1x768xf32, #tpu.memory_space<vmem>>, %arg2: memref<32x72xf32, #tpu.memory_space<vmem>>, %arg3: memref<32x1xf32, #tpu.memory_space<vmem>>, %arg4: memref<32x128xf32, #tpu.memory_space<vmem>>, %arg5: memref<32x1xf32, #tpu.memory_space<vmem>>, %arg6: memref<8x1xf32, #tpu.memory_space<vmem>>, %arg7: memref<8x1xf32, #tpu.memory_space<vmem>>, %arg8: memref<32x768xf32, #tpu.memory_space<vmem>>, %arg9: memref<4x8x1024xf32, #tpu.memory_space<vmem>>, %arg10: memref<72x768xf32, #tpu.memory_space<vmem>>, %arg11: memref<128x768xf32, #tpu.memory_space<vmem>>) attributes {dimension_semantics = [], scalar_prefetch = 0 : i64, scratch_operands = 3 : i64, tpu.core_type = #tpu.core_type<tc>} {
    %c0 = arith.constant 0 : index
    %c0_0 = arith.constant 0 : index
    %0 = vector.load %arg1[%c0, %c0_0] : memref<1x768xf32, #tpu.memory_space<vmem>>, vector<1x768xf32>
    %c0_1 = arith.constant 0 : index
    %c0_2 = arith.constant 0 : index
    %1 = vector.load %arg0[%c0_1, %c0_2] : memref<8x896xf32, #tpu.memory_space<vmem>>, vector<8x768xf32>
    %c0_3 = arith.constant 0 : index
    %c0_4 = arith.constant 0 : index
    %2 = vector.load %arg10[%c0_3, %c0_4] : memref<72x768xf32, #tpu.memory_space<vmem>>, vector<8x768xf32>
    tpu.vector_store %arg10[%c0_3, %c0_4], %1 {strides = array<i32>} : memref<72x768xf32, #tpu.memory_space<vmem>>, vector<8x768xf32>,
    %c0_5 = arith.constant 0 : index
    %c1 = arith.constant 1 : index
    %3 = vector.load %arg0[%c0_5, %c1] : memref<8x896xf32, #tpu.memory_space<vmem>>, vector<8x768xf32>
    %c8 = arith.constant 8 : index
    %c0_6 = arith.constant 0 : index
    %4 = vector.load %arg10[%c8, %c0_6] : memref<72x768xf32, #tpu.memory_space<vmem>>, vector<8x768xf32>
    tpu.vector_store %arg10[%c8, %c0_6], %3 {strides = array<i32>} : memref<72x768xf32, #tpu.memory_space<vmem>>, vector<8x768xf32>,
    %c0_7 = arith.constant 0 : index
    %c2 = arith.constant 2 : index
    %5 = vector.load %arg0[%c0_7, %c2] : memref<8x896xf32, #tpu.memory_space<vmem>>, vector<8x768xf32>
    %c16 = arith.constant 16 : index
    %c0_8 = arith.constant 0 : index
    %6 = vector.load %arg10[%c16, %c0_8] : memref<72x768xf32, #tpu.memory_space<vmem>>, vector<8x768xf32>
    tpu.vector_store %arg10[%c16, %c0_8], %5 {strides = array<i32>} : memref<72x768xf32, #tpu.memory_space<vmem>>, vector<8x768xf32>,
    %c0_9 = arith.constant 0 : index
    %c18 = arith.constant 18 : index
    %7 = vector.load %arg0[%c0_9, %c18] : memref<8x896xf32, #tpu.memory_space<vmem>>, vector<8x768xf32>
    %c24 = arith.constant 24 : index
    %c0_10 = arith.constant 0 : index
    %8 = vector.load %arg10[%c24, %c0_10] : memref<72x768xf32, #tpu.memory_space<vmem>>, vector<8x768xf32>
    tpu.vector_store %arg10[%c24, %c0_10], %7 {strides = array<i32>} : memref<72x768xf32, #tpu.memory_space<vmem>>, vector<8x768xf32>,
    %c0_11 = arith.constant 0 : index
    %c19 = arith.constant 19 : index
    %9 = vector.load %arg0[%c0_11, %c19] : memref<8x896xf32, #tpu.memory_space<vmem>>, vector<8x768xf32>
    %c32 = arith.constant 32 : index
    %c0_12 = arith.constant 0 : index
    %10 = vector.load %arg10[%c32, %c0_12] : memref<72x768xf32, #tpu.memory_space<vmem>>, vector<8x768xf32>
    tpu.vector_store %arg10[%c32, %c0_12], %9 {strides = array<i32>} : memref<72x768xf32, #tpu.memory_space<vmem>>, vector<8x768xf32>,
    %c0_13 = arith.constant 0 : index
    %c20 = arith.constant 20 : index
    %11 = vector.load %arg0[%c0_13, %c20] : memref<8x896xf32, #tpu.memory_space<vmem>>, vector<8x768xf32>
    %c40 = arith.constant 40 : index
    %c0_14 = arith.constant 0 : index
    %12 = vector.load %arg10[%c40, %c0_14] : memref<72x768xf32, #tpu.memory_space<vmem>>, vector<8x768xf32>
    tpu.vector_store %arg10[%c40, %c0_14], %11 {strides = array<i32>} : memref<72x768xf32, #tpu.memory_space<vmem>>, vector<8x768xf32>,
    %c0_15 = arith.constant 0 : index
    %c36 = arith.constant 36 : index
    %13 = vector.load %arg0[%c0_15, %c36] : memref<8x896xf32, #tpu.memory_space<vmem>>, vector<8x768xf32>
    %c48 = arith.constant 48 : index
    %c0_16 = arith.constant 0 : index
    %14 = vector.load %arg10[%c48, %c0_16] : memref<72x768xf32, #tpu.memory_space<vmem>>, vector<8x768xf32>
    tpu.vector_store %arg10[%c48, %c0_16], %13 {strides = array<i32>} : memref<72x768xf32, #tpu.memory_space<vmem>>, vector<8x768xf32>,
    %c0_17 = arith.constant 0 : index
    %c37 = arith.constant 37 : index
    %15 = vector.load %arg0[%c0_17, %c37] : memref<8x896xf32, #tpu.memory_space<vmem>>, vector<8x768xf32>
    %c56 = arith.constant 56 : index
    %c0_18 = arith.constant 0 : index
    %16 = vector.load %arg10[%c56, %c0_18] : memref<72x768xf32, #tpu.memory_space<vmem>>, vector<8x768xf32>
    tpu.vector_store %arg10[%c56, %c0_18], %15 {strides = array<i32>} : memref<72x768xf32, #tpu.memory_space<vmem>>, vector<8x768xf32>,
    %c0_19 = arith.constant 0 : index
    %c38 = arith.constant 38 : index
    %17 = vector.load %arg0[%c0_19, %c38] : memref<8x896xf32, #tpu.memory_space<vmem>>, vector<8x768xf32>
    %c64 = arith.constant 64 : index
    %c0_20 = arith.constant 0 : index
    %18 = vector.load %arg10[%c64, %c0_20] : memref<72x768xf32, #tpu.memory_space<vmem>>, vector<8x768xf32>
    tpu.vector_store %arg10[%c64, %c0_20], %17 {strides = array<i32>} : memref<72x768xf32, #tpu.memory_space<vmem>>, vector<8x768xf32>,
    %c0_21 = arith.constant 0 : index
    %c0_22 = arith.constant 0 : index
    %19 = vector.load %arg2[%c0_21, %c0_22] : memref<32x72xf32, #tpu.memory_space<vmem>>, vector<32x72xf32>
    %c0_23 = arith.constant 0 : index
    %c0_24 = arith.constant 0 : index
    %20 = vector.load %arg10[%c0_23, %c0_24] : memref<72x768xf32, #tpu.memory_space<vmem>>, vector<72x768xf32>
    %cst = arith.constant dense<0.000000e+00> : vector<32x768xf32>
    %21 = tpu.matmul %19, %20, %cst {dimension_numbers = #tpu.dot_dimension_numbers<[1], [0], [0], [1], [0, 0, 1, 1], [], []>} : vector<32x72xf32>, vector<72x768xf32>, vector<32x768xf32> -> vector<32x768xf32>
    %c0_25 = arith.constant 0 : index
    %c0_26 = arith.constant 0 : index
    %22 = vector.load %arg3[%c0_25, %c0_26] : memref<32x1xf32, #tpu.memory_space<vmem>>, vector<32x1xf32>
    %23 = vector.broadcast %22 : vector<32x1xf32> to vector<32x768xf32>
    %24 = arith.addf %21, %23 : vector<32x768xf32>
    %25 = vector.broadcast %0 : vector<1x768xf32> to vector<32x768xf32>
    %26 = arith.mulf %24, %25 : vector<32x768xf32>
    %cst_27 = arith.constant 0.000000e+00 : f32
    %27 = vector.broadcast %cst_27 : f32 to vector<8x128xf32>
    %cst_28 = arith.constant 0.000000e+00 : f32
    %28 = vector.broadcast %cst_28 : f32 to vector<8x128xf32>
    %c0_29 = arith.constant 0 : index
    %c0_30 = arith.constant 0 : index
    %c0_31 = arith.constant 0 : index
    %29 = vector.load %arg9[%c0_29, %c0_30, %c0_31] : memref<4x8x1024xf32, #tpu.memory_space<vmem>>, vector<1x8x128xf32>
    %30 = vector.shape_cast %29 : vector<1x8x128xf32> to vector<8x128xf32>
    %31 = vector.shape_cast %27 : vector<8x128xf32> to vector<1x8x128xf32>
    tpu.vector_store %arg9[%c0_29, %c0_30, %c0_31], %31 {strides = array<i32>} : memref<4x8x1024xf32, #tpu.memory_space<vmem>>, vector<1x8x128xf32>,
    %c0_32 = arith.constant 0 : index
    %c0_33 = arith.constant 0 : index
    %c896 = arith.constant 896 : index
    %32 = vector.load %arg9[%c0_32, %c0_33, %c896] : memref<4x8x1024xf32, #tpu.memory_space<vmem>>, vector<1x8x128xf32>
    %33 = vector.shape_cast %32 : vector<1x8x128xf32> to vector<8x128xf32>
    %34 = vector.shape_cast %28 : vector<8x128xf32> to vector<1x8x128xf32>
    tpu.vector_store %arg9[%c0_32, %c0_33, %c896], %34 {strides = array<i32>} : memref<4x8x1024xf32, #tpu.memory_space<vmem>>, vector<1x8x128xf32>,
    %35 = vector.extract_strided_slice %26 {offsets = [0, 0], sizes = [8, 768], strides = [1, 1]} : vector<32x768xf32> to vector<8x768xf32>
    %c0_34 = arith.constant 0 : index
    %c0_35 = arith.constant 0 : index
    %c128 = arith.constant 128 : index
    %36 = vector.load %arg9[%c0_34, %c0_35, %c128] : memref<4x8x1024xf32, #tpu.memory_space<vmem>>, vector<1x8x768xf32>
    %37 = vector.shape_cast %36 : vector<1x8x768xf32> to vector<8x768xf32>
    %38 = vector.shape_cast %35 : vector<8x768xf32> to vector<1x8x768xf32>
    tpu.vector_store %arg9[%c0_34, %c0_35, %c128], %38 {strides = array<i32>} : memref<4x8x1024xf32, #tpu.memory_space<vmem>>, vector<1x8x768xf32>,
    %c1_36 = arith.constant 1 : index
    %c0_37 = arith.constant 0 : index
    %c0_38 = arith.constant 0 : index
    %39 = vector.load %arg9[%c1_36, %c0_37, %c0_38] : memref<4x8x1024xf32, #tpu.memory_space<vmem>>, vector<1x8x128xf32>
    %40 = vector.shape_cast %39 : vector<1x8x128xf32> to vector<8x128xf32>
    %41 = vector.shape_cast %27 : vector<8x128xf32> to vector<1x8x128xf32>
    tpu.vector_store %arg9[%c1_36, %c0_37, %c0_38], %41 {strides = array<i32>} : memref<4x8x1024xf32, #tpu.memory_space<vmem>>, vector<1x8x128xf32>,
    %c1_39 = arith.constant 1 : index
    %c0_40 = arith.constant 0 : index
    %c896_41 = arith.constant 896 : index
    %42 = vector.load %arg9[%c1_39, %c0_40, %c896_41] : memref<4x8x1024xf32, #tpu.memory_space<vmem>>, vector<1x8x128xf32>
    %43 = vector.shape_cast %42 : vector<1x8x128xf32> to vector<8x128xf32>
    %44 = vector.shape_cast %28 : vector<8x128xf32> to vector<1x8x128xf32>
    tpu.vector_store %arg9[%c1_39, %c0_40, %c896_41], %44 {strides = array<i32>} : memref<4x8x1024xf32, #tpu.memory_space<vmem>>, vector<1x8x128xf32>,
    %45 = vector.extract_strided_slice %26 {offsets = [8, 0], sizes = [8, 768], strides = [1, 1]} : vector<32x768xf32> to vector<8x768xf32>
    %c1_42 = arith.constant 1 : index
    %c0_43 = arith.constant 0 : index
    %c128_44 = arith.constant 128 : index
    %46 = vector.load %arg9[%c1_42, %c0_43, %c128_44] : memref<4x8x1024xf32, #tpu.memory_space<vmem>>, vector<1x8x768xf32>
    %47 = vector.shape_cast %46 : vector<1x8x768xf32> to vector<8x768xf32>
    %48 = vector.shape_cast %45 : vector<8x768xf32> to vector<1x8x768xf32>
    tpu.vector_store %arg9[%c1_42, %c0_43, %c128_44], %48 {strides = array<i32>} : memref<4x8x1024xf32, #tpu.memory_space<vmem>>, vector<1x8x768xf32>,
    %c2_45 = arith.constant 2 : index
    %c0_46 = arith.constant 0 : index
    %c0_47 = arith.constant 0 : index
    %49 = vector.load %arg9[%c2_45, %c0_46, %c0_47] : memref<4x8x1024xf32, #tpu.memory_space<vmem>>, vector<1x8x128xf32>
    %50 = vector.shape_cast %49 : vector<1x8x128xf32> to vector<8x128xf32>
    %51 = vector.shape_cast %27 : vector<8x128xf32> to vector<1x8x128xf32>
    tpu.vector_store %arg9[%c2_45, %c0_46, %c0_47], %51 {strides = array<i32>} : memref<4x8x1024xf32, #tpu.memory_space<vmem>>, vector<1x8x128xf32>,
    %c2_48 = arith.constant 2 : index
    %c0_49 = arith.constant 0 : index
    %c896_50 = arith.constant 896 : index
    %52 = vector.load %arg9[%c2_48, %c0_49, %c896_50] : memref<4x8x1024xf32, #tpu.memory_space<vmem>>, vector<1x8x128xf32>
    %53 = vector.shape_cast %52 : vector<1x8x128xf32> to vector<8x128xf32>
    %54 = vector.shape_cast %28 : vector<8x128xf32> to vector<1x8x128xf32>
    tpu.vector_store %arg9[%c2_48, %c0_49, %c896_50], %54 {strides = array<i32>} : memref<4x8x1024xf32, #tpu.memory_space<vmem>>, vector<1x8x128xf32>,
    %55 = vector.extract_strided_slice %26 {offsets = [16, 0], sizes = [8, 768], strides = [1, 1]} : vector<32x768xf32> to vector<8x768xf32>
    %c2_51 = arith.constant 2 : index
    %c0_52 = arith.constant 0 : index
    %c128_53 = arith.constant 128 : index
    %56 = vector.load %arg9[%c2_51, %c0_52, %c128_53] : memref<4x8x1024xf32, #tpu.memory_space<vmem>>, vector<1x8x768xf32>
    %57 = vector.shape_cast %56 : vector<1x8x768xf32> to vector<8x768xf32>
    %58 = vector.shape_cast %55 : vector<8x768xf32> to vector<1x8x768xf32>
    tpu.vector_store %arg9[%c2_51, %c0_52, %c128_53], %58 {strides = array<i32>} : memref<4x8x1024xf32, #tpu.memory_space<vmem>>, vector<1x8x768xf32>,
    %c3 = arith.constant 3 : index
    %c0_54 = arith.constant 0 : index
    %c0_55 = arith.constant 0 : index
    %59 = vector.load %arg9[%c3, %c0_54, %c0_55] : memref<4x8x1024xf32, #tpu.memory_space<vmem>>, vector<1x8x128xf32>
    %60 = vector.shape_cast %59 : vector<1x8x128xf32> to vector<8x128xf32>
    %61 = vector.shape_cast %27 : vector<8x128xf32> to vector<1x8x128xf32>
    tpu.vector_store %arg9[%c3, %c0_54, %c0_55], %61 {strides = array<i32>} : memref<4x8x1024xf32, #tpu.memory_space<vmem>>, vector<1x8x128xf32>,
    %c3_56 = arith.constant 3 : index
    %c0_57 = arith.constant 0 : index
    %c896_58 = arith.constant 896 : index
    %62 = vector.load %arg9[%c3_56, %c0_57, %c896_58] : memref<4x8x1024xf32, #tpu.memory_space<vmem>>, vector<1x8x128xf32>
    %63 = vector.shape_cast %62 : vector<1x8x128xf32> to vector<8x128xf32>
    %64 = vector.shape_cast %28 : vector<8x128xf32> to vector<1x8x128xf32>
    tpu.vector_store %arg9[%c3_56, %c0_57, %c896_58], %64 {strides = array<i32>} : memref<4x8x1024xf32, #tpu.memory_space<vmem>>, vector<1x8x128xf32>,
    %65 = vector.extract_strided_slice %26 {offsets = [24, 0], sizes = [8, 768], strides = [1, 1]} : vector<32x768xf32> to vector<8x768xf32>
    %c3_59 = arith.constant 3 : index
    %c0_60 = arith.constant 0 : index
    %c128_61 = arith.constant 128 : index
    %66 = vector.load %arg9[%c3_59, %c0_60, %c128_61] : memref<4x8x1024xf32, #tpu.memory_space<vmem>>, vector<1x8x768xf32>
    %67 = vector.shape_cast %66 : vector<1x8x768xf32> to vector<8x768xf32>
    %68 = vector.shape_cast %65 : vector<8x768xf32> to vector<1x8x768xf32>
    tpu.vector_store %arg9[%c3_59, %c0_60, %c128_61], %68 {strides = array<i32>} : memref<4x8x1024xf32, #tpu.memory_space<vmem>>, vector<1x8x768xf32>,
    %c0_62 = arith.constant 0 : index
    %c0_63 = arith.constant 0 : index
    %c128_64 = arith.constant 128 : index
    %69 = vector.load %arg9[%c0_62, %c0_63, %c128_64] : memref<4x8x1024xf32, #tpu.memory_space<vmem>>, vector<1x8x768xf32>
    %70 = vector.shape_cast %69 : vector<1x8x768xf32> to vector<8x768xf32>
    %c0_65 = arith.constant 0 : index
    %c0_66 = arith.constant 0 : index
    %71 = vector.load %arg11[%c0_65, %c0_66] : memref<128x768xf32, #tpu.memory_space<vmem>>, vector<8x768xf32>
    tpu.vector_store %arg11[%c0_65, %c0_66], %70 {strides = array<i32>} : memref<128x768xf32, #tpu.memory_space<vmem>>, vector<8x768xf32>,
    %c0_67 = arith.constant 0 : index
    %c0_68 = arith.constant 0 : index
    %c129 = arith.constant 129 : index
    %72 = vector.load %arg9[%c0_67, %c0_68, %c129] : memref<4x8x1024xf32, #tpu.memory_space<vmem>>, vector<1x8x768xf32>
    %73 = vector.shape_cast %72 : vector<1x8x768xf32> to vector<8x768xf32>
    %c8_69 = arith.constant 8 : index
    %c0_70 = arith.constant 0 : index
    %74 = vector.load %arg11[%c8_69, %c0_70] : memref<128x768xf32, #tpu.memory_space<vmem>>, vector<8x768xf32>
    tpu.vector_store %arg11[%c8_69, %c0_70], %73 {strides = array<i32>} : memref<128x768xf32, #tpu.memory_space<vmem>>, vector<8x768xf32>,
    %c0_71 = arith.constant 0 : index
    %c0_72 = arith.constant 0 : index
    %c146 = arith.constant 146 : index
    %75 = vector.load %arg9[%c0_71, %c0_72, %c146] : memref<4x8x1024xf32, #tpu.memory_space<vmem>>, vector<1x8x768xf32>
    %76 = vector.shape_cast %75 : vector<1x8x768xf32> to vector<8x768xf32>
    %c16_73 = arith.constant 16 : index
    %c0_74 = arith.constant 0 : index
    %77 = vector.load %arg11[%c16_73, %c0_74] : memref<128x768xf32, #tpu.memory_space<vmem>>, vector<8x768xf32>
    tpu.vector_store %arg11[%c16_73, %c0_74], %76 {strides = array<i32>} : memref<128x768xf32, #tpu.memory_space<vmem>>, vector<8x768xf32>,
    %c0_75 = arith.constant 0 : index
    %c0_76 = arith.constant 0 : index
    %c147 = arith.constant 147 : index
    %78 = vector.load %arg9[%c0_75, %c0_76, %c147] : memref<4x8x1024xf32, #tpu.memory_space<vmem>>, vector<1x8x768xf32>
    %79 = vector.shape_cast %78 : vector<1x8x768xf32> to vector<8x768xf32>
    %c24_77 = arith.constant 24 : index
    %c0_78 = arith.constant 0 : index
    %80 = vector.load %arg11[%c24_77, %c0_78] : memref<128x768xf32, #tpu.memory_space<vmem>>, vector<8x768xf32>
    tpu.vector_store %arg11[%c24_77, %c0_78], %79 {strides = array<i32>} : memref<128x768xf32, #tpu.memory_space<vmem>>, vector<8x768xf32>,
    %c1_79 = arith.constant 1 : index
    %c0_80 = arith.constant 0 : index
    %c127 = arith.constant 127 : index
    %81 = vector.load %arg9[%c1_79, %c0_80, %c127] : memref<4x8x1024xf32, #tpu.memory_space<vmem>>, vector<1x8x768xf32>
    %82 = vector.shape_cast %81 : vector<1x8x768xf32> to vector<8x768xf32>
    %c32_81 = arith.constant 32 : index
    %c0_82 = arith.constant 0 : index
    %83 = vector.load %arg11[%c32_81, %c0_82] : memref<128x768xf32, #tpu.memory_space<vmem>>, vector<8x768xf32>
    tpu.vector_store %arg11[%c32_81, %c0_82], %82 {strides = array<i32>} : memref<128x768xf32, #tpu.memory_space<vmem>>, vector<8x768xf32>,
    %c1_83 = arith.constant 1 : index
    %c0_84 = arith.constant 0 : index
    %c128_85 = arith.constant 128 : index
    %84 = vector.load %arg9[%c1_83, %c0_84, %c128_85] : memref<4x8x1024xf32, #tpu.memory_space<vmem>>, vector<1x8x768xf32>
    %85 = vector.shape_cast %84 : vector<1x8x768xf32> to vector<8x768xf32>
    %c40_86 = arith.constant 40 : index
    %c0_87 = arith.constant 0 : index
    %86 = vector.load %arg11[%c40_86, %c0_87] : memref<128x768xf32, #tpu.memory_space<vmem>>, vector<8x768xf32>
    tpu.vector_store %arg11[%c40_86, %c0_87], %85 {strides = array<i32>} : memref<128x768xf32, #tpu.memory_space<vmem>>, vector<8x768xf32>,
    %c1_88 = arith.constant 1 : index
    %c0_89 = arith.constant 0 : index
    %c145 = arith.constant 145 : index
    %87 = vector.load %arg9[%c1_88, %c0_89, %c145] : memref<4x8x1024xf32, #tpu.memory_space<vmem>>, vector<1x8x768xf32>
    %88 = vector.shape_cast %87 : vector<1x8x768xf32> to vector<8x768xf32>
    %c48_90 = arith.constant 48 : index
    %c0_91 = arith.constant 0 : index
    %89 = vector.load %arg11[%c48_90, %c0_91] : memref<128x768xf32, #tpu.memory_space<vmem>>, vector<8x768xf32>
    tpu.vector_store %arg11[%c48_90, %c0_91], %88 {strides = array<i32>} : memref<128x768xf32, #tpu.memory_space<vmem>>, vector<8x768xf32>,
    %c1_92 = arith.constant 1 : index
    %c0_93 = arith.constant 0 : index
    %c146_94 = arith.constant 146 : index
    %90 = vector.load %arg9[%c1_92, %c0_93, %c146_94] : memref<4x8x1024xf32, #tpu.memory_space<vmem>>, vector<1x8x768xf32>
    %91 = vector.shape_cast %90 : vector<1x8x768xf32> to vector<8x768xf32>
    %c56_95 = arith.constant 56 : index
    %c0_96 = arith.constant 0 : index
    %92 = vector.load %arg11[%c56_95, %c0_96] : memref<128x768xf32, #tpu.memory_space<vmem>>, vector<8x768xf32>
    tpu.vector_store %arg11[%c56_95, %c0_96], %91 {strides = array<i32>} : memref<128x768xf32, #tpu.memory_space<vmem>>, vector<8x768xf32>,
    %c2_97 = arith.constant 2 : index
    %c0_98 = arith.constant 0 : index
    %c110 = arith.constant 110 : index
    %93 = vector.load %arg9[%c2_97, %c0_98, %c110] : memref<4x8x1024xf32, #tpu.memory_space<vmem>>, vector<1x8x768xf32>
    %94 = vector.shape_cast %93 : vector<1x8x768xf32> to vector<8x768xf32>
    %c64_99 = arith.constant 64 : index
    %c0_100 = arith.constant 0 : index
    %95 = vector.load %arg11[%c64_99, %c0_100] : memref<128x768xf32, #tpu.memory_space<vmem>>, vector<8x768xf32>
    tpu.vector_store %arg11[%c64_99, %c0_100], %94 {strides = array<i32>} : memref<128x768xf32, #tpu.memory_space<vmem>>, vector<8x768xf32>,
    %c2_101 = arith.constant 2 : index
    %c0_102 = arith.constant 0 : index
    %c111 = arith.constant 111 : index
    %96 = vector.load %arg9[%c2_101, %c0_102, %c111] : memref<4x8x1024xf32, #tpu.memory_space<vmem>>, vector<1x8x768xf32>
    %97 = vector.shape_cast %96 : vector<1x8x768xf32> to vector<8x768xf32>
    %c72 = arith.constant 72 : index
    %c0_103 = arith.constant 0 : index
    %98 = vector.load %arg11[%c72, %c0_103] : memref<128x768xf32, #tpu.memory_space<vmem>>, vector<8x768xf32>
    tpu.vector_store %arg11[%c72, %c0_103], %97 {strides = array<i32>} : memref<128x768xf32, #tpu.memory_space<vmem>>, vector<8x768xf32>,
    %c2_104 = arith.constant 2 : index
    %c0_105 = arith.constant 0 : index
    %c128_106 = arith.constant 128 : index
    %99 = vector.load %arg9[%c2_104, %c0_105, %c128_106] : memref<4x8x1024xf32, #tpu.memory_space<vmem>>, vector<1x8x768xf32>
    %100 = vector.shape_cast %99 : vector<1x8x768xf32> to vector<8x768xf32>
    %c80 = arith.constant 80 : index
    %c0_107 = arith.constant 0 : index
    %101 = vector.load %arg11[%c80, %c0_107] : memref<128x768xf32, #tpu.memory_space<vmem>>, vector<8x768xf32>
    tpu.vector_store %arg11[%c80, %c0_107], %100 {strides = array<i32>} : memref<128x768xf32, #tpu.memory_space<vmem>>, vector<8x768xf32>,
    %c2_108 = arith.constant 2 : index
    %c0_109 = arith.constant 0 : index
    %c129_110 = arith.constant 129 : index
    %102 = vector.load %arg9[%c2_108, %c0_109, %c129_110] : memref<4x8x1024xf32, #tpu.memory_space<vmem>>, vector<1x8x768xf32>
    %103 = vector.shape_cast %102 : vector<1x8x768xf32> to vector<8x768xf32>
    %c88 = arith.constant 88 : index
    %c0_111 = arith.constant 0 : index
    %104 = vector.load %arg11[%c88, %c0_111] : memref<128x768xf32, #tpu.memory_space<vmem>>, vector<8x768xf32>
    tpu.vector_store %arg11[%c88, %c0_111], %103 {strides = array<i32>} : memref<128x768xf32, #tpu.memory_space<vmem>>, vector<8x768xf32>,
    %c3_112 = arith.constant 3 : index
    %c0_113 = arith.constant 0 : index
    %c109 = arith.constant 109 : index
    %105 = vector.load %arg9[%c3_112, %c0_113, %c109] : memref<4x8x1024xf32, #tpu.memory_space<vmem>>, vector<1x8x768xf32>
    %106 = vector.shape_cast %105 : vector<1x8x768xf32> to vector<8x768xf32>
    %c96 = arith.constant 96 : index
    %c0_114 = arith.constant 0 : index
    %107 = vector.load %arg11[%c96, %c0_114] : memref<128x768xf32, #tpu.memory_space<vmem>>, vector<8x768xf32>
    tpu.vector_store %arg11[%c96, %c0_114], %106 {strides = array<i32>} : memref<128x768xf32, #tpu.memory_space<vmem>>, vector<8x768xf32>,
    %c3_115 = arith.constant 3 : index
    %c0_116 = arith.constant 0 : index
    %c110_117 = arith.constant 110 : index
    %108 = vector.load %arg9[%c3_115, %c0_116, %c110_117] : memref<4x8x1024xf32, #tpu.memory_space<vmem>>, vector<1x8x768xf32>
    %109 = vector.shape_cast %108 : vector<1x8x768xf32> to vector<8x768xf32>
    %c104 = arith.constant 104 : index
    %c0_118 = arith.constant 0 : index
    %110 = vector.load %arg11[%c104, %c0_118] : memref<128x768xf32, #tpu.memory_space<vmem>>, vector<8x768xf32>
    tpu.vector_store %arg11[%c104, %c0_118], %109 {strides = array<i32>} : memref<128x768xf32, #tpu.memory_space<vmem>>, vector<8x768xf32>,
    %c3_119 = arith.constant 3 : index
    %c0_120 = arith.constant 0 : index
    %c127_121 = arith.constant 127 : index
    %111 = vector.load %arg9[%c3_119, %c0_120, %c127_121] : memref<4x8x1024xf32, #tpu.memory_space<vmem>>, vector<1x8x768xf32>
    %112 = vector.shape_cast %111 : vector<1x8x768xf32> to vector<8x768xf32>
    %c112 = arith.constant 112 : index
    %c0_122 = arith.constant 0 : index
    %113 = vector.load %arg11[%c112, %c0_122] : memref<128x768xf32, #tpu.memory_space<vmem>>, vector<8x768xf32>
    tpu.vector_store %arg11[%c112, %c0_122], %112 {strides = array<i32>} : memref<128x768xf32, #tpu.memory_space<vmem>>, vector<8x768xf32>,
    %c3_123 = arith.constant 3 : index
    %c0_124 = arith.constant 0 : index
    %c128_125 = arith.constant 128 : index
    %114 = vector.load %arg9[%c3_123, %c0_124, %c128_125] : memref<4x8x1024xf32, #tpu.memory_space<vmem>>, vector<1x8x768xf32>
    %115 = vector.shape_cast %114 : vector<1x8x768xf32> to vector<8x768xf32>
    %c120 = arith.constant 120 : index
    %c0_126 = arith.constant 0 : index
    %116 = vector.load %arg11[%c120, %c0_126] : memref<128x768xf32, #tpu.memory_space<vmem>>, vector<8x768xf32>
    tpu.vector_store %arg11[%c120, %c0_126], %115 {strides = array<i32>} : memref<128x768xf32, #tpu.memory_space<vmem>>, vector<8x768xf32>,
    %c0_127 = arith.constant 0 : index
    %c0_128 = arith.constant 0 : index
    %117 = vector.load %arg4[%c0_127, %c0_128] : memref<32x128xf32, #tpu.memory_space<vmem>>, vector<32x128xf32>
    %c0_129 = arith.constant 0 : index
    %c0_130 = arith.constant 0 : index
    %118 = vector.load %arg11[%c0_129, %c0_130] : memref<128x768xf32, #tpu.memory_space<vmem>>, vector<128x768xf32>
    %cst_131 = arith.constant dense<0.000000e+00> : vector<32x768xf32>
    %119 = tpu.matmul %117, %118, %cst_131 {dimension_numbers = #tpu.dot_dimension_numbers<[1], [0], [0], [1], [0, 0, 1, 1], [], []>} : vector<32x128xf32>, vector<128x768xf32>, vector<32x768xf32> -> vector<32x768xf32>
    %c0_132 = arith.constant 0 : index
    %c0_133 = arith.constant 0 : index
    %120 = vector.load %arg5[%c0_132, %c0_133] : memref<32x1xf32, #tpu.memory_space<vmem>>, vector<32x1xf32>
    %121 = vector.broadcast %120 : vector<32x1xf32> to vector<32x768xf32>
    %122 = arith.addf %119, %121 : vector<32x768xf32>
    %123 = vector.broadcast %0 : vector<1x768xf32> to vector<32x768xf32>
    %124 = arith.mulf %122, %123 : vector<32x768xf32>
    %cst_134 = arith.constant dense<0.000000e+00> : vector<32xf32>
    %125 = vector.multi_reduction <add>, %124, %cst_134 [1] : vector<32x768xf32> to vector<32xf32>
    %126 = vector.shape_cast %125 : vector<32xf32> to vector<32x1xf32>
    %127 = arith.mulf %124, %124 : vector<32x768xf32>
    %cst_135 = arith.constant dense<0.000000e+00> : vector<32xf32>
    %128 = vector.multi_reduction <add>, %127, %cst_135 [1] : vector<32x768xf32> to vector<32xf32>
    %129 = vector.shape_cast %128 : vector<32xf32> to vector<32x1xf32>
    %130 = vector.extract_strided_slice %126 {offsets = [0, 0], sizes = [8, 1], strides = [1, 1]} : vector<32x1xf32> to vector<8x1xf32>
    %131 = vector.extract_strided_slice %126 {offsets = [8, 0], sizes = [8, 1], strides = [1, 1]} : vector<32x1xf32> to vector<8x1xf32>
    %132 = arith.addf %130, %131 : vector<8x1xf32>
    %133 = vector.extract_strided_slice %126 {offsets = [16, 0], sizes = [8, 1], strides = [1, 1]} : vector<32x1xf32> to vector<8x1xf32>
    %134 = arith.addf %132, %133 : vector<8x1xf32>
    %135 = vector.extract_strided_slice %126 {offsets = [24, 0], sizes = [8, 1], strides = [1, 1]} : vector<32x1xf32> to vector<8x1xf32>
    %136 = arith.addf %134, %135 : vector<8x1xf32>
    %137 = vector.extract_strided_slice %129 {offsets = [0, 0], sizes = [8, 1], strides = [1, 1]} : vector<32x1xf32> to vector<8x1xf32>
    %138 = vector.extract_strided_slice %129 {offsets = [8, 0], sizes = [8, 1], strides = [1, 1]} : vector<32x1xf32> to vector<8x1xf32>
    %139 = arith.addf %137, %138 : vector<8x1xf32>
    %140 = vector.extract_strided_slice %129 {offsets = [16, 0], sizes = [8, 1], strides = [1, 1]} : vector<32x1xf32> to vector<8x1xf32>
    %141 = arith.addf %139, %140 : vector<8x1xf32>
    %142 = vector.extract_strided_slice %129 {offsets = [24, 0], sizes = [8, 1], strides = [1, 1]} : vector<32x1xf32> to vector<8x1xf32>
    %143 = arith.addf %141, %142 : vector<8x1xf32>
    %cst_136 = arith.constant 4.8828125E-4 : f32
    %144 = vector.broadcast %cst_136 : f32 to vector<8x1xf32>
    %145 = arith.mulf %136, %144 : vector<8x1xf32>
    %cst_137 = arith.constant 4.8828125E-4 : f32
    %146 = vector.broadcast %cst_137 : f32 to vector<8x1xf32>
    %147 = arith.mulf %143, %146 : vector<8x1xf32>
    %148 = arith.mulf %145, %145 : vector<8x1xf32>
    %149 = arith.subf %147, %148 : vector<8x1xf32>
    %c0_138 = arith.constant 0 : index
    %c0_139 = arith.constant 0 : index
    %150 = vector.load %arg6[%c0_138, %c0_139] : memref<8x1xf32, #tpu.memory_space<vmem>>, vector<8x1xf32>
    %cst_140 = arith.constant 9.99999974E-6 : f32
    %151 = vector.broadcast %cst_140 : f32 to vector<8x1xf32>
    %152 = arith.addf %149, %151 : vector<8x1xf32>
    %153 = math.rsqrt %152 : vector<8x1xf32>
    %154 = arith.mulf %150, %153 : vector<8x1xf32>
    %c0_141 = arith.constant 0 : index
    %c0_142 = arith.constant 0 : index
    %155 = vector.load %arg7[%c0_141, %c0_142] : memref<8x1xf32, #tpu.memory_space<vmem>>, vector<8x1xf32>
    %156 = arith.mulf %145, %154 : vector<8x1xf32>
    %157 = arith.subf %155, %156 : vector<8x1xf32>
    %158 = vector.extract_strided_slice %122 {offsets = [0, 0], sizes = [8, 768], strides = [1, 1]} : vector<32x768xf32> to vector<8x768xf32>
    %159 = vector.broadcast %154 : vector<8x1xf32> to vector<8x768xf32>
    %160 = arith.mulf %158, %159 : vector<8x768xf32>
    %161 = vector.broadcast %157 : vector<8x1xf32> to vector<8x768xf32>
    %162 = arith.addf %160, %161 : vector<8x768xf32>
    %cst_143 = arith.constant 0.000000e+00 : f32
    %163 = vector.broadcast %cst_143 : f32 to vector<8x768xf32>
    %164 = arith.cmpf oge, %162, %163 : vector<8x768xf32>
    %cst_144 = arith.constant 0.00999999977 : f32
    %165 = vector.broadcast %cst_144 : f32 to vector<8x768xf32>
    %166 = arith.mulf %165, %162 : vector<8x768xf32>
    %167 = arith.select %164, %162, %166 : vector<8x768xi1>, vector<8x768xf32>
    %c0_145 = arith.constant 0 : index
    %c0_146 = arith.constant 0 : index
    %168 = vector.load %arg8[%c0_145, %c0_146] : memref<32x768xf32, #tpu.memory_space<vmem>>, vector<8x768xf32>
    tpu.vector_store %arg8[%c0_145, %c0_146], %167 {strides = array<i32>} : memref<32x768xf32, #tpu.memory_space<vmem>>, vector<8x768xf32>,
    %169 = vector.extract_strided_slice %122 {offsets = [8, 0], sizes = [8, 768], strides = [1, 1]} : vector<32x768xf32> to vector<8x768xf32>
    %170 = vector.broadcast %154 : vector<8x1xf32> to vector<8x768xf32>
    %171 = arith.mulf %169, %170 : vector<8x768xf32>
    %172 = vector.broadcast %157 : vector<8x1xf32> to vector<8x768xf32>
    %173 = arith.addf %171, %172 : vector<8x768xf32>
    %cst_147 = arith.constant 0.000000e+00 : f32
    %174 = vector.broadcast %cst_147 : f32 to vector<8x768xf32>
    %175 = arith.cmpf oge, %173, %174 : vector<8x768xf32>
    %cst_148 = arith.constant 0.00999999977 : f32
    %176 = vector.broadcast %cst_148 : f32 to vector<8x768xf32>
    %177 = arith.mulf %176, %173 : vector<8x768xf32>
    %178 = arith.select %175, %173, %177 : vector<8x768xi1>, vector<8x768xf32>
    %c8_149 = arith.constant 8 : index
    %c0_150 = arith.constant 0 : index
    %179 = vector.load %arg8[%c8_149, %c0_150] : memref<32x768xf32, #tpu.memory_space<vmem>>, vector<8x768xf32>
    tpu.vector_store %arg8[%c8_149, %c0_150], %178 {strides = array<i32>} : memref<32x768xf32, #tpu.memory_space<vmem>>, vector<8x768xf32>,
    %180 = vector.extract_strided_slice %122 {offsets = [16, 0], sizes = [8, 768], strides = [1, 1]} : vector<32x768xf32> to vector<8x768xf32>
    %181 = vector.broadcast %154 : vector<8x1xf32> to vector<8x768xf32>
    %182 = arith.mulf %180, %181 : vector<8x768xf32>
    %183 = vector.broadcast %157 : vector<8x1xf32> to vector<8x768xf32>
    %184 = arith.addf %182, %183 : vector<8x768xf32>
    %cst_151 = arith.constant 0.000000e+00 : f32
    %185 = vector.broadcast %cst_151 : f32 to vector<8x768xf32>
    %186 = arith.cmpf oge, %184, %185 : vector<8x768xf32>
    %cst_152 = arith.constant 0.00999999977 : f32
    %187 = vector.broadcast %cst_152 : f32 to vector<8x768xf32>
    %188 = arith.mulf %187, %184 : vector<8x768xf32>
    %189 = arith.select %186, %184, %188 : vector<8x768xi1>, vector<8x768xf32>
    %c16_153 = arith.constant 16 : index
    %c0_154 = arith.constant 0 : index
    %190 = vector.load %arg8[%c16_153, %c0_154] : memref<32x768xf32, #tpu.memory_space<vmem>>, vector<8x768xf32>
    tpu.vector_store %arg8[%c16_153, %c0_154], %189 {strides = array<i32>} : memref<32x768xf32, #tpu.memory_space<vmem>>, vector<8x768xf32>,
    %191 = vector.extract_strided_slice %122 {offsets = [24, 0], sizes = [8, 768], strides = [1, 1]} : vector<32x768xf32> to vector<8x768xf32>
    %192 = vector.broadcast %154 : vector<8x1xf32> to vector<8x768xf32>
    %193 = arith.mulf %191, %192 : vector<8x768xf32>
    %194 = vector.broadcast %157 : vector<8x1xf32> to vector<8x768xf32>
    %195 = arith.addf %193, %194 : vector<8x768xf32>
    %cst_155 = arith.constant 0.000000e+00 : f32
    %196 = vector.broadcast %cst_155 : f32 to vector<8x768xf32>
    %197 = arith.cmpf oge, %195, %196 : vector<8x768xf32>
    %cst_156 = arith.constant 0.00999999977 : f32
    %198 = vector.broadcast %cst_156 : f32 to vector<8x768xf32>
    %199 = arith.mulf %198, %195 : vector<8x768xf32>
    %200 = arith.select %197, %195, %199 : vector<8x768xi1>, vector<8x768xf32>
    %c24_157 = arith.constant 24 : index
    %c0_158 = arith.constant 0 : index
    %201 = vector.load %arg8[%c24_157, %c0_158] : memref<32x768xf32, #tpu.memory_space<vmem>>, vector<8x768xf32>
    tpu.vector_store %arg8[%c24_157, %c0_158], %200 {strides = array<i32>} : memref<32x768xf32, #tpu.memory_space<vmem>>, vector<8x768xf32>,
    return
  }
}

</mosaic_0001>

<llo_original>
// kernel: forward.1
$region0: #{forward.1}
  #allocation0 [shape = 'u32[]', space=smem, size = 0x4, offset = 0x4, fixed_abs, tag = 'smem constant byte address 0x4 - core index']
  #allocation1 [shape = 'u32[144,128]{1,0:T(1,128)}', space=vmem, size = 0x12000, scoped, tag = 'internal scratch']
  #allocation2 [shape = 'f32[4,8,1024]{2,1,0:T(8,128)}', space=vmem, size = 0x20000, scoped, tag = 'scratch operand']
  #allocation3 [shape = 'f32[72,768]{1,0:T(8,128)}', space=vmem, size = 0x36000, scoped, tag = 'scratch operand']
  #allocation4 [shape = 'f32[128,768]{1,0:T(8,128)}', space=vmem, size = 0x60000, scoped, tag = 'scratch operand']
  %s0 = inlined_call_operand.vmem [shape: f32[8,896], index: 0, kind: input, shape index: {}]
  %s1 = inlined_call_operand.vmem [shape: f32[1,768], index: 1, kind: input, shape index: {}]
  %s2 = inlined_call_operand.vmem [shape: f32[32,72], index: 2, kind: input, shape index: {}]
  %s3 = inlined_call_operand.vmem [shape: f32[32,1], index: 3, kind: input, shape index: {}]
  %s4 = inlined_call_operand.vmem [shape: f32[32,128], index: 4, kind: input, shape index: {}]
  %s5 = inlined_call_operand.vmem [shape: f32[32,1], index: 5, kind: input, shape index: {}]
  %s6 = inlined_call_operand.vmem [shape: f32[8,1], index: 6, kind: input, shape index: {}]
  %s7 = inlined_call_operand.vmem [shape: f32[8,1], index: 7, kind: input, shape index: {}]
  %s8 = inlined_call_operand.vmem [shape: f32[32,768], index: 8, kind: output, shape index: {}]
  %s9 = sld [smem:[#allocation0]]
  $region42: #{forward.1} parent=0
    _
  %s11 = ssub.s32 1, %s9
  %s12 = scalar_select 0, %s11, %s9
  // Predicated region
  $region2: #{forward.1} parent=0 // pred_check
    _
  $region3: #{forward.1} parent=0 // pred_check_branch
    %14 = sbr.rel (0) target = $region5
  $region4: #{forward.1} parent=0 // pred_region
    _
  $region5: #{forward.1} parent=0 // pred_fallthru
    _
  // Predicated region
  $region6: #{forward.1} parent=0 // pred_check
    _
  $region7: #{forward.1} parent=0 // pred_check_branch
    %16 = sbr.rel (0) target = $region9
  $region8: #{forward.1} parent=0 // pred_region
    _
  $region9: #{forward.1} parent=0 // pred_fallthru
    _
  // Predicated region
  $region10: #{forward.1} parent=0 // pred_check
    _
  $region11: #{forward.1} parent=0 // pred_check_branch
    %18 = sbr.rel (0) target = $region13
  $region12: #{forward.1} parent=0 // pred_region
    _
  $region13: #{forward.1} parent=0 // pred_fallthru
    _
  // Predicated region
  $region14: #{forward.1} parent=0 // pred_check
    _
  $region15: #{forward.1} parent=0 // pred_check_branch
    %20 = sbr.rel (0) target = $region17
  $region16: #{forward.1} parent=0 // pred_region
    _
  $region17: #{forward.1} parent=0 // pred_fallthru
    _
  // Predicated region
  $region18: #{forward.1} parent=0 // pred_check
    _
  $region19: #{forward.1} parent=0 // pred_check_branch
    %22 = sbr.rel (0) target = $region21
  $region20: #{forward.1} parent=0 // pred_region
    _
  $region21: #{forward.1} parent=0 // pred_fallthru
    _
  // Predicated region
  $region22: #{forward.1} parent=0 // pred_check
    _
  $region23: #{forward.1} parent=0 // pred_check_branch
    %24 = sbr.rel (0) target = $region25
  $region24: #{forward.1} parent=0 // pred_region
    _
  $region25: #{forward.1} parent=0 // pred_fallthru
    _
  // Predicated region
  $region26: #{forward.1} parent=0 // pred_check
    _
  $region27: #{forward.1} parent=0 // pred_check_branch
    %26 = sbr.rel (0) target = $region29
  $region28: #{forward.1} parent=0 // pred_region
    _
  $region29: #{forward.1} parent=0 // pred_fallthru
    _
  // Predicated region
  $region30: #{forward.1} parent=0 // pred_check
    _
  $region31: #{forward.1} parent=0 // pred_check_branch
    %28 = sbr.rel (0) target = $region33
  $region32: #{forward.1} parent=0 // pred_region
    _
  $region33: #{forward.1} parent=0 // pred_fallthru
    _
  %v29 = vld [vmem:[%s1] sm:$0x3f]
  %v30 = vld [vmem:[%s0] sm:$0xff]
  %v31 = vld [vmem:[%s0 + $0x8] sm:$0xff]
  %v32 = vld [vmem:[%s0 + $0x10] sm:$0xff]
  %v33 = vld [vmem:[%s0 + $0x18] sm:$0xff]
  %v34 = vld [vmem:[%s0 + $0x20] sm:$0xff]
  %v35 = vld [vmem:[%s0 + $0x28] sm:$0xff]
  %36 = vst [vmem:[#allocation3] sm:$0xff] %v30
  %37 = vst [vmem:[#allocation3 + $0x8] sm:$0xff] %v31
  %38 = vst [vmem:[#allocation3 + $0x10] sm:$0xff] %v32
  %39 = vst [vmem:[#allocation3 + $0x18] sm:$0xff] %v33
  %40 = vst [vmem:[#allocation3 + $0x20] sm:$0xff] %v34
  %41 = vst [vmem:[#allocation3 + $0x28] sm:$0xff] %v35
  %v42 = vld [vmem:[%s0] sm:$0xff]
  %v43 = vld [vmem:[%s0 + $0x8] sm:$0xff]
  %v44 = vld [vmem:[%s0 + $0x10] sm:$0xff]
  %v45 = vld [vmem:[%s0 + $0x18] sm:$0xff]
  %v46 = vld [vmem:[%s0 + $0x20] sm:$0xff]
  %v47 = vld [vmem:[%s0 + $0x28] sm:$0xff]
  %v48 = vld [vmem:[%s0 + $0x30] sm:$0xff]
  %56 = vrot.lane.b32.xlu0 %v42, 127
  %v57 = vpop.permute.xlu0 %56
  %58 = vrot.lane.b32.xlu0 %v43, 127
  %v59 = vpop.permute.xlu0 %58
  %60 = vrot.lane.b32.xlu0 %v44, 127
  %v61 = vpop.permute.xlu0 %60
  %62 = vrot.lane.b32.xlu0 %v45, 127
  %v63 = vpop.permute.xlu0 %62
  %64 = vrot.lane.b32.xlu0 %v46, 127
  %v65 = vpop.permute.xlu0 %64
  %66 = vrot.lane.b32.xlu0 %v47, 127
  %v67 = vpop.permute.xlu0 %66
  %68 = vrot.lane.b32.xlu0 %v48, 127
  %v69 = vpop.permute.xlu0 %68
  %vm70 = vcmask 1039360
  %v71 = vsel %vm70, %v57, %v59
  %v72 = vsel %vm70, %v59, %v61
  %v73 = vsel %vm70, %v61, %v63
  %v74 = vsel %vm70, %v63, %v65
  %v75 = vsel %vm70, %v65, %v67
  %v76 = vsel %vm70, %v67, %v69
  %83 = vst [vmem:[#allocation3 + $0x30] sm:$0xff] %v71
  %84 = vst [vmem:[#allocation3 + $0x38] sm:$0xff] %v72
  %85 = vst [vmem:[#allocation3 + $0x40] sm:$0xff] %v73
  %86 = vst [vmem:[#allocation3 + $0x48] sm:$0xff] %v74
  %87 = vst [vmem:[#allocation3 + $0x50] sm:$0xff] %v75
  %88 = vst [vmem:[#allocation3 + $0x58] sm:$0xff] %v76
  %v89 = vld [vmem:[%s0] sm:$0xff]
  %v90 = vld [vmem:[%s0 + $0x8] sm:$0xff]
  %v91 = vld [vmem:[%s0 + $0x10] sm:$0xff]
  %v92 = vld [vmem:[%s0 + $0x18] sm:$0xff]
  %v93 = vld [vmem:[%s0 + $0x20] sm:$0xff]
  %v94 = vld [vmem:[%s0 + $0x28] sm:$0xff]
  %v95 = vld [vmem:[%s0 + $0x30] sm:$0xff]
  %103 = vrot.lane.b32.xlu0 %v89, 126
  %v104 = vpop.permute.xlu0 %103
  %105 = vrot.lane.b32.xlu0 %v90, 126
  %v106 = vpop.permute.xlu0 %105
  %107 = vrot.lane.b32.xlu0 %v91, 126
  %v108 = vpop.permute.xlu0 %107
  %109 = vrot.lane.b32.xlu0 %v92, 126
  %v110 = vpop.permute.xlu0 %109
  %111 = vrot.lane.b32.xlu0 %v93, 126
  %v112 = vpop.permute.xlu0 %111
  %113 = vrot.lane.b32.xlu0 %v94, 126
  %v114 = vpop.permute.xlu0 %113
  %115 = vrot.lane.b32.xlu0 %v95, 126
  %v116 = vpop.permute.xlu0 %115
  %vm117 = vcmask 1031168
  %v118 = vsel %vm117, %v104, %v106
  %v119 = vsel %vm117, %v106, %v108
  %v120 = vsel %vm117, %v108, %v110
  %v121 = vsel %vm117, %v110, %v112
  %v122 = vsel %vm117, %v112, %v114
  %v123 = vsel %vm117, %v114, %v116
  %130 = vst [vmem:[#allocation3 + $0x60] sm:$0xff] %v118
  %131 = vst [vmem:[#allocation3 + $0x68] sm:$0xff] %v119
  %132 = vst [vmem:[#allocation3 + $0x70] sm:$0xff] %v120
  %133 = vst [vmem:[#allocation3 + $0x78] sm:$0xff] %v121
  %134 = vst [vmem:[#allocation3 + $0x80] sm:$0xff] %v122
  %135 = vst [vmem:[#allocation3 + $0x88] sm:$0xff] %v123
  %v136 = vld [vmem:[%s0] sm:$0xff]
  %v137 = vld [vmem:[%s0 + $0x8] sm:$0xff]
  %v138 = vld [vmem:[%s0 + $0x10] sm:$0xff]
  %v139 = vld [vmem:[%s0 + $0x18] sm:$0xff]
  %v140 = vld [vmem:[%s0 + $0x20] sm:$0xff]
  %v141 = vld [vmem:[%s0 + $0x28] sm:$0xff]
  %v142 = vld [vmem:[%s0 + $0x30] sm:$0xff]
  %150 = vrot.lane.b32.xlu0 %v136, 110
  %v151 = vpop.permute.xlu0 %150
  %152 = vrot.lane.b32.xlu0 %v137, 110
  %v153 = vpop.permute.xlu0 %152
  %154 = vrot.lane.b32.xlu0 %v138, 110
  %v155 = vpop.permute.xlu0 %154
  %156 = vrot.lane.b32.xlu0 %v139, 110
  %v157 = vpop.permute.xlu0 %156
  %158 = vrot.lane.b32.xlu0 %v140, 110
  %v159 = vpop.permute.xlu0 %158
  %160 = vrot.lane.b32.xlu0 %v141, 110
  %v161 = vpop.permute.xlu0 %160
  %162 = vrot.lane.b32.xlu0 %v142, 110
  %v163 = vpop.permute.xlu0 %162
  %vm164 = vcmask 900096
  %v165 = vsel %vm164, %v151, %v153
  %v166 = vsel %vm164, %v153, %v155
  %v167 = vsel %vm164, %v155, %v157
  %v168 = vsel %vm164, %v157, %v159
  %v169 = vsel %vm164, %v159, %v161
  %v170 = vsel %vm164, %v161, %v163
  %177 = vst [vmem:[#allocation3 + $0x90] sm:$0xff] %v165
  %178 = vst [vmem:[#allocation3 + $0x98] sm:$0xff] %v166
  %179 = vst [vmem:[#allocation3 + $0xa0] sm:$0xff] %v167
  %180 = vst [vmem:[#allocation3 + $0xa8] sm:$0xff] %v168
  %181 = vst [vmem:[#allocation3 + $0xb0] sm:$0xff] %v169
  %182 = vst [vmem:[#allocation3 + $0xb8] sm:$0xff] %v170
  %v183 = vld [vmem:[%s0] sm:$0xff]
  %v184 = vld [vmem:[%s0 + $0x8] sm:$0xff]
  %v185 = vld [vmem:[%s0 + $0x10] sm:$0xff]
  %v186 = vld [vmem:[%s0 + $0x18] sm:$0xff]
  %v187 = vld [vmem:[%s0 + $0x20] sm:$0xff]
  %v188 = vld [vmem:[%s0 + $0x28] sm:$0xff]
  %v189 = vld [vmem:[%s0 + $0x30] sm:$0xff]
  %197 = vrot.lane.b32.xlu0 %v183, 109
  %v198 = vpop.permute.xlu0 %197
  %199 = vrot.lane.b32.xlu0 %v184, 109
  %v200 = vpop.permute.xlu0 %199
  %201 = vrot.lane.b32.xlu0 %v185, 109
  %v202 = vpop.permute.xlu0 %201
  %203 = vrot.lane.b32.xlu0 %v186, 109
  %v204 = vpop.permute.xlu0 %203
  %205 = vrot.lane.b32.xlu0 %v187, 109
  %v206 = vpop.permute.xlu0 %205
  %207 = vrot.lane.b32.xlu0 %v188, 109
  %v208 = vpop.permute.xlu0 %207
  %209 = vrot.lane.b32.xlu0 %v189, 109
  %v210 = vpop.permute.xlu0 %209
  %vm211 = vcmask 891904
  %v212 = vsel %vm211, %v198, %v200
  %v213 = vsel %vm211, %v200, %v202
  %v214 = vsel %vm211, %v202, %v204
  %v215 = vsel %vm211, %v204, %v206
  %v216 = vsel %vm211, %v206, %v208
  %v217 = vsel %vm211, %v208, %v210
  %224 = vst [vmem:[#allocation3 + $0xc0] sm:$0xff] %v212
  %225 = vst [vmem:[#allocation3 + $0xc8] sm:$0xff] %v213
  %226 = vst [vmem:[#allocation3 + $0xd0] sm:$0xff] %v214
  %227 = vst [vmem:[#allocation3 + $0xd8] sm:$0xff] %v215
  %228 = vst [vmem:[#allocation3 + $0xe0] sm:$0xff] %v216
  %229 = vst [vmem:[#allocation3 + $0xe8] sm:$0xff] %v217
  %v230 = vld [vmem:[%s0] sm:$0xff]
  %v231 = vld [vmem:[%s0 + $0x8] sm:$0xff]
  %v232 = vld [vmem:[%s0 + $0x10] sm:$0xff]
  %v233 = vld [vmem:[%s0 + $0x18] sm:$0xff]
  %v234 = vld [vmem:[%s0 + $0x20] sm:$0xff]
  %v235 = vld [vmem:[%s0 + $0x28] sm:$0xff]
  %v236 = vld [vmem:[%s0 + $0x30] sm:$0xff]
  %244 = vrot.lane.b32.xlu0 %v230, 108
  %v245 = vpop.permute.xlu0 %244
  %246 = vrot.lane.b32.xlu0 %v231, 108
  %v247 = vpop.permute.xlu0 %246
  %248 = vrot.lane.b32.xlu0 %v232, 108
  %v249 = vpop.permute.xlu0 %248
  %250 = vrot.lane.b32.xlu0 %v233, 108
  %v251 = vpop.permute.xlu0 %250
  %252 = vrot.lane.b32.xlu0 %v234, 108
  %v253 = vpop.permute.xlu0 %252
  %254 = vrot.lane.b32.xlu0 %v235, 108
  %v255 = vpop.permute.xlu0 %254
  %256 = vrot.lane.b32.xlu0 %v236, 108
  %v257 = vpop.permute.xlu0 %256
  %vm258 = vcmask 883712
  %v259 = vsel %vm258, %v245, %v247
  %v260 = vsel %vm258, %v247, %v249
  %v261 = vsel %vm258, %v249, %v251
  %v262 = vsel %vm258, %v251, %v253
  %v263 = vsel %vm258, %v253, %v255
  %v264 = vsel %vm258, %v255, %v257
  %271 = vst [vmem:[#allocation3 + $0xf0] sm:$0xff] %v259
  %272 = vst [vmem:[#allocation3 + $0xf8] sm:$0xff] %v260
  %273 = vst [vmem:[#allocation3 + $0x100] sm:$0xff] %v261
  %274 = vst [vmem:[#allocation3 + $0x108] sm:$0xff] %v262
  %275 = vst [vmem:[#allocation3 + $0x110] sm:$0xff] %v263
  %276 = vst [vmem:[#allocation3 + $0x118] sm:$0xff] %v264
  %v277 = vld [vmem:[%s0] sm:$0xff]
  %v278 = vld [vmem:[%s0 + $0x8] sm:$0xff]
  %v279 = vld [vmem:[%s0 + $0x10] sm:$0xff]
  %v280 = vld [vmem:[%s0 + $0x18] sm:$0xff]
  %v281 = vld [vmem:[%s0 + $0x20] sm:$0xff]
  %v282 = vld [vmem:[%s0 + $0x28] sm:$0xff]
  %v283 = vld [vmem:[%s0 + $0x30] sm:$0xff]
  %291 = vrot.lane.b32.xlu0 %v277, 92
  %v292 = vpop.permute.xlu0 %291
  %293 = vrot.lane.b32.xlu0 %v278, 92
  %v294 = vpop.permute.xlu0 %293
  %295 = vrot.lane.b32.xlu0 %v279, 92
  %v296 = vpop.permute.xlu0 %295
  %297 = vrot.lane.b32.xlu0 %v280, 92
  %v298 = vpop.permute.xlu0 %297
  %299 = vrot.lane.b32.xlu0 %v281, 92
  %v300 = vpop.permute.xlu0 %299
  %301 = vrot.lane.b32.xlu0 %v282, 92
  %v302 = vpop.permute.xlu0 %301
  %303 = vrot.lane.b32.xlu0 %v283, 92
  %v304 = vpop.permute.xlu0 %303
  %vm305 = vcmask 752640
  %v306 = vsel %vm305, %v292, %v294
  %v307 = vsel %vm305, %v294, %v296
  %v308 = vsel %vm305, %v296, %v298
  %v309 = vsel %vm305, %v298, %v300
  %v310 = vsel %vm305, %v300, %v302
  %v311 = vsel %vm305, %v302, %v304
  %318 = vst [vmem:[#allocation3 + $0x120] sm:$0xff] %v306
  %319 = vst [vmem:[#allocation3 + $0x128] sm:$0xff] %v307
  %320 = vst [vmem:[#allocation3 + $0x130] sm:$0xff] %v308
  %321 = vst [vmem:[#allocation3 + $0x138] sm:$0xff] %v309
  %322 = vst [vmem:[#allocation3 + $0x140] sm:$0xff] %v310
  %323 = vst [vmem:[#allocation3 + $0x148] sm:$0xff] %v311
  %v324 = vld [vmem:[%s0] sm:$0xff]
  %v325 = vld [vmem:[%s0 + $0x8] sm:$0xff]
  %v326 = vld [vmem:[%s0 + $0x10] sm:$0xff]
  %v327 = vld [vmem:[%s0 + $0x18] sm:$0xff]
  %v328 = vld [vmem:[%s0 + $0x20] sm:$0xff]
  %v329 = vld [vmem:[%s0 + $0x28] sm:$0xff]
  %v330 = vld [vmem:[%s0 + $0x30] sm:$0xff]
  %338 = vrot.lane.b32.xlu0 %v324, 91
  %v339 = vpop.permute.xlu0 %338
  %340 = vrot.lane.b32.xlu0 %v325, 91
  %v341 = vpop.permute.xlu0 %340
  %342 = vrot.lane.b32.xlu0 %v326, 91
  %v343 = vpop.permute.xlu0 %342
  %344 = vrot.lane.b32.xlu0 %v327, 91
  %v345 = vpop.permute.xlu0 %344
  %346 = vrot.lane.b32.xlu0 %v328, 91
  %v347 = vpop.permute.xlu0 %346
  %348 = vrot.lane.b32.xlu0 %v329, 91
  %v349 = vpop.permute.xlu0 %348
  %350 = vrot.lane.b32.xlu0 %v330, 91
  %v351 = vpop.permute.xlu0 %350
  %vm352 = vcmask 744448
  %v353 = vsel %vm352, %v339, %v341
  %v354 = vsel %vm352, %v341, %v343
  %v355 = vsel %vm352, %v343, %v345
  %v356 = vsel %vm352, %v345, %v347
  %v357 = vsel %vm352, %v347, %v349
  %v358 = vsel %vm352, %v349, %v351
  %365 = vst [vmem:[#allocation3 + $0x150] sm:$0xff] %v353
  %366 = vst [vmem:[#allocation3 + $0x158] sm:$0xff] %v354
  %367 = vst [vmem:[#allocation3 + $0x160] sm:$0xff] %v355
  %368 = vst [vmem:[#allocation3 + $0x168] sm:$0xff] %v356
  %369 = vst [vmem:[#allocation3 + $0x170] sm:$0xff] %v357
  %370 = vst [vmem:[#allocation3 + $0x178] sm:$0xff] %v358
  %v371 = vld [vmem:[%s0] sm:$0xff]
  %v372 = vld [vmem:[%s0 + $0x8] sm:$0xff]
  %v373 = vld [vmem:[%s0 + $0x10] sm:$0xff]
  %v374 = vld [vmem:[%s0 + $0x18] sm:$0xff]
  %v375 = vld [vmem:[%s0 + $0x20] sm:$0xff]
  %v376 = vld [vmem:[%s0 + $0x28] sm:$0xff]
  %v377 = vld [vmem:[%s0 + $0x30] sm:$0xff]
  %385 = vrot.lane.b32.xlu0 %v371, 90
  %v386 = vpop.permute.xlu0 %385
  %387 = vrot.lane.b32.xlu0 %v372, 90
  %v388 = vpop.permute.xlu0 %387
  %389 = vrot.lane.b32.xlu0 %v373, 90
  %v390 = vpop.permute.xlu0 %389
  %391 = vrot.lane.b32.xlu0 %v374, 90
  %v392 = vpop.permute.xlu0 %391
  %393 = vrot.lane.b32.xlu0 %v375, 90
  %v394 = vpop.permute.xlu0 %393
  %395 = vrot.lane.b32.xlu0 %v376, 90
  %v396 = vpop.permute.xlu0 %395
  %397 = vrot.lane.b32.xlu0 %v377, 90
  %v398 = vpop.permute.xlu0 %397
  %vm399 = vcmask 736256
  %v400 = vsel %vm399, %v386, %v388
  %v401 = vsel %vm399, %v388, %v390
  %v402 = vsel %vm399, %v390, %v392
  %v403 = vsel %vm399, %v392, %v394
  %v404 = vsel %vm399, %v394, %v396
  %v405 = vsel %vm399, %v396, %v398
  %412 = vst [vmem:[#allocation3 + $0x180] sm:$0xff] %v400
  %413 = vst [vmem:[#allocation3 + $0x188] sm:$0xff] %v401
  %414 = vst [vmem:[#allocation3 + $0x190] sm:$0xff] %v402
  %415 = vst [vmem:[#allocation3 + $0x198] sm:$0xff] %v403
  %416 = vst [vmem:[#allocation3 + $0x1a0] sm:$0xff] %v404
  %417 = vst [vmem:[#allocation3 + $0x1a8] sm:$0xff] %v405
  %v418 = vld [vmem:[%s2] sm:$0xff]
  %v419 = vld [vmem:[%s2 + $0x8] sm:$0xff]
  %v420 = vld [vmem:[%s2 + $0x10] sm:$0xff]
  %v421 = vld [vmem:[%s2 + $0x18] sm:$0xff]
  %v422 = vld [vmem:[#allocation3] sm:$0xff]
  %v423 = vld [vmem:[#allocation3 + $0x8] sm:$0xff]
  %v424 = vld [vmem:[#allocation3 + $0x10] sm:$0xff]
  %v425 = vld [vmem:[#allocation3 + $0x18] sm:$0xff]
  %v426 = vld [vmem:[#allocation3 + $0x20] sm:$0xff]
  %v427 = vld [vmem:[#allocation3 + $0x28] sm:$0xff]
  %v428 = vld [vmem:[#allocation3 + $0x30] sm:$0xff]
  %v429 = vld [vmem:[#allocation3 + $0x38] sm:$0xff]
  %v430 = vld [vmem:[#allocation3 + $0x40] sm:$0xff]
  %v431 = vld [vmem:[#allocation3 + $0x48] sm:$0xff]
  %v432 = vld [vmem:[#allocation3 + $0x50] sm:$0xff]
  %v433 = vld [vmem:[#allocation3 + $0x58] sm:$0xff]
  %v434 = vld [vmem:[#allocation3 + $0x60] sm:$0xff]
  %v435 = vld [vmem:[#allocation3 + $0x68] sm:$0xff]
  %v436 = vld [vmem:[#allocation3 + $0x70] sm:$0xff]
  %v437 = vld [vmem:[#allocation3 + $0x78] sm:$0xff]
  %v438 = vld [vmem:[#allocation3 + $0x80] sm:$0xff]
  %v439 = vld [vmem:[#allocation3 + $0x88] sm:$0xff]
  %v440 = vld [vmem:[#allocation3 + $0x90] sm:$0xff]
  %v441 = vld [vmem:[#allocation3 + $0x98] sm:$0xff]
  %v442 = vld [vmem:[#allocation3 + $0xa0] sm:$0xff]
  %v443 = vld [vmem:[#allocation3 + $0xa8] sm:$0xff]
  %v444 = vld [vmem:[#allocation3 + $0xb0] sm:$0xff]
  %v445 = vld [vmem:[#allocation3 + $0xb8] sm:$0xff]
  %v446 = vld [vmem:[#allocation3 + $0xc0] sm:$0xff]
  %v447 = vld [vmem:[#allocation3 + $0xc8] sm:$0xff]
  %v448 = vld [vmem:[#allocation3 + $0xd0] sm:$0xff]
  %v449 = vld [vmem:[#allocation3 + $0xd8] sm:$0xff]
  %v450 = vld [vmem:[#allocation3 + $0xe0] sm:$0xff]
  %v451 = vld [vmem:[#allocation3 + $0xe8] sm:$0xff]
  %v452 = vld [vmem:[#allocation3 + $0xf0] sm:$0xff]
  %v453 = vld [vmem:[#allocation3 + $0xf8] sm:$0xff]
  %v454 = vld [vmem:[#allocation3 + $0x100] sm:$0xff]
  %v455 = vld [vmem:[#allocation3 + $0x108] sm:$0xff]
  %v456 = vld [vmem:[#allocation3 + $0x110] sm:$0xff]
  %v457 = vld [vmem:[#allocation3 + $0x118] sm:$0xff]
  %v458 = vld [vmem:[#allocation3 + $0x120] sm:$0xff]
  %v459 = vld [vmem:[#allocation3 + $0x128] sm:$0xff]
  %v460 = vld [vmem:[#allocation3 + $0x130] sm:$0xff]
  %v461 = vld [vmem:[#allocation3 + $0x138] sm:$0xff]
  %v462 = vld [vmem:[#allocation3 + $0x140] sm:$0xff]
  %v463 = vld [vmem:[#allocation3 + $0x148] sm:$0xff]
  %v464 = vld [vmem:[#allocation3 + $0x150] sm:$0xff]
  %v465 = vld [vmem:[#allocation3 + $0x158] sm:$0xff]
  %v466 = vld [vmem:[#allocation3 + $0x160] sm:$0xff]
  %v467 = vld [vmem:[#allocation3 + $0x168] sm:$0xff]
  %v468 = vld [vmem:[#allocation3 + $0x170] sm:$0xff]
  %v469 = vld [vmem:[#allocation3 + $0x178] sm:$0xff]
  %v470 = vld [vmem:[#allocation3 + $0x180] sm:$0xff]
  %v471 = vld [vmem:[#allocation3 + $0x188] sm:$0xff]
  %v472 = vld [vmem:[#allocation3 + $0x190] sm:$0xff]
  %v473 = vld [vmem:[#allocation3 + $0x198] sm:$0xff]
  %v474 = vld [vmem:[#allocation3 + $0x1a0] sm:$0xff]
  %v475 = vld [vmem:[#allocation3 + $0x1a8] sm:$0xff]
  %v476 = vld [vmem:[%s3] sm:$0xff]
  %v477 = vld [vmem:[%s3 + $0x8] sm:$0xff]
  %v478 = vld [vmem:[%s3 + $0x10] sm:$0xff]
  %v479 = vld [vmem:[%s3 + $0x18] sm:$0xff]
  %481 = vset.pattern.permute.xlu0 0
  %482 = vperm.xlu0 %481, %v476
  %v483 = vpop.permute.xlu0 %482
  %486 = vset.pattern.permute.xlu0 0
  %487 = vperm.xlu0 %486, %v477
  %v488 = vpop.permute.xlu0 %487
  %491 = vset.pattern.permute.xlu0 0
  %492 = vperm.xlu0 %491, %v478
  %v493 = vpop.permute.xlu0 %492
  %496 = vset.pattern.permute.xlu0 0
  %497 = vperm.xlu0 %496, %v479
  %v498 = vpop.permute.xlu0 %497
  %vm500 = vcmask 588800
  %v502 = vsel %vm500, %v418, 0
  %v505 = vsel %vm500, %v419, 0
  %v508 = vsel %vm500, %v420, 0
  %v511 = vsel %vm500, %v421, 0
  %513 = vmatprep.subr.mxu0 %v423
  %514 = vmatpush1.msra.mxu0 %v422
  %515 = vmatprep.subr.mxu0 %v429
  %516 = vmatpush1.msra.mxu0 %v428
  %517 = vmatprep.subr.mxu0 %v435
  %518 = vmatpush1.msra.mxu0 %v434
  %519 = vmatprep.subr.mxu0 %v441
  %520 = vmatpush1.msra.mxu0 %v440
  %521 = vmatprep.subr.mxu0 %v447
  %522 = vmatpush1.msra.mxu0 %v446
  %523 = vmatprep.subr.mxu0 %v453
  %524 = vmatpush1.msra.mxu0 %v452
  %525 = vmatprep.subr.mxu0 %v459
  %526 = vmatpush1.msra.mxu0 %v458
  %527 = vmatprep.subr.mxu0 %v465
  %528 = vmatpush1.msra.mxu0 %v464
  %529 = vmatprep.subr.mxu0 %v471
  %530 = vmatpush1.msra.mxu0 %v470
  %531 = vmatprep.subr.mxu0 0.0
  %532 = vmatpush1.msra.mxu0 0.0
  %533 = vmatprep.subr.mxu0 0.0
  %534 = vmatpush1.msra.mxu0 0.0
  %535 = vmatprep.subr.mxu0 0.0
  %536 = vmatpush1.msra.mxu0 0.0
  %537 = vmatprep.subr.mxu0 0.0
  %538 = vmatpush1.msra.mxu0 0.0
  %539 = vmatprep.subr.mxu0 0.0
  %540 = vmatpush1.msra.mxu0 0.0
  %541 = vmatprep.subr.mxu0 0.0
  %542 = vmatpush1.msra.mxu0 0.0
  %543 = vmatprep.subr.mxu0 0.0
  %544 = vmatpush1.msra.mxu0 0.0
  %545 = vmatprep.subr.mxu0 0.0
  %546 = vmatpush1.msra.mxu0 0.0
  %547 = vmatprep.subr.mxu0 0.0
  %548 = vmatpush1.msra.mxu0 0.0
  %549 = vmatprep.subr.mxu0 0.0
  %550 = vmatpush1.msra.mxu0 0.0
  %551 = vmatprep.subr.mxu0 0.0
  %552 = vmatpush1.msra.mxu0 0.0
  %553 = vmatprep.subr.mxu0 0.0
  %554 = vmatpush1.msra.mxu0 0.0
  %555 = vmatprep.subr.mxu0 0.0
  %556 = vmatpush1.msra.mxu0 0.0
  %557 = vmatprep.subr.mxu0 0.0
  %558 = vmatpush1.msra.mxu0 0.0
  %559 = vmatprep.subr.mxu0 0.0
  %560 = vmatpush1.msra.mxu0 0.0
  %561 = vmatprep.subr.mxu0 0.0
  %562 = vmatpush1.msra.mxu0 0.0
  %563 = vmatprep.subr.mxu0 0.0
  %564 = vmatpush1.msra.mxu0 0.0
  %565 = vmatprep.subr.mxu0 0.0
  %566 = vmatpush1.msra.mxu0 0.0
  %567 = vmatprep.subr.mxu0 0.0
  %568 = vmatpush1.msra.mxu0 0.0
  %569 = vmatprep.subr.mxu0 0.0
  %570 = vmatpush1.msra.mxu0 0.0
  %571 = vmatprep.subr.mxu0 0.0
  %572 = vmatpush1.msra.mxu0 0.0
  %573 = vmatprep.subr.mxu0 0.0
  %574 = vmatpush1.msra.mxu0 0.0
  %575 = vmatprep.subr.mxu0 0.0
  %576 = vmatpush1.msra.mxu0 0.0
  %577 = vmatprep.mubr.f32.mxu0 0.0
  %578 = vmatmul.mubr.f32.gmra.mrb[0].mxu0 %v502
  %v579 = vpop.f32.mrb[0].mxu0
  %v580 = vadd.f32 %v483, %v579
  %v581 = vpop.f32.mrb[0].mxu0
  %v582 = vadd.f32 %v483, %v581
  %583 = vmatprep.mubr.f32.mxu0 0.0
  %584 = vmatmul.mubr.f32.gmra.mrb[0].mxu0 %v505
  %v585 = vpop.f32.mrb[0].mxu0
  %v586 = vadd.f32 %v488, %v585
  %v587 = vpop.f32.mrb[0].mxu0
  %v588 = vadd.f32 %v488, %v587
  %589 = vmatprep.mubr.f32.mxu0 0.0
  %590 = vmatmul.mubr.f32.gmra.mrb[0].mxu0 %v508
  %v591 = vpop.f32.mrb[0].mxu0
  %v592 = vadd.f32 %v493, %v591
  %v593 = vpop.f32.mrb[0].mxu0
  %v594 = vadd.f32 %v493, %v593
  %595 = vmatprep.mubr.f32.mxu0 0.0
  %596 = vmatmul.mubr.f32.gmra.mrb[0].mxu0 %v511
  %v597 = vpop.f32.mrb[0].mxu0
  %v598 = vadd.f32 %v498, %v597
  %v599 = vpop.f32.mrb[0].mxu0
  %v600 = vadd.f32 %v498, %v599
  %601 = vdwg.mxu0
  %602 = vmatprep.subr.mxu0 %v425
  %603 = vmatpush1.msra.mxu0 %v424
  %604 = vmatprep.subr.mxu0 %v431
  %605 = vmatpush1.msra.mxu0 %v430
  %606 = vmatprep.subr.mxu0 %v437
  %607 = vmatpush1.msra.mxu0 %v436
  %608 = vmatprep.subr.mxu0 %v443
  %609 = vmatpush1.msra.mxu0 %v442
  %610 = vmatprep.subr.mxu0 %v449
  %611 = vmatpush1.msra.mxu0 %v448
  %612 = vmatprep.subr.mxu0 %v455
  %613 = vmatpush1.msra.mxu0 %v454
  %614 = vmatprep.subr.mxu0 %v461
  %615 = vmatpush1.msra.mxu0 %v460
  %616 = vmatprep.subr.mxu0 %v467
  %617 = vmatpush1.msra.mxu0 %v466
  %618 = vmatprep.subr.mxu0 %v473
  %619 = vmatpush1.msra.mxu0 %v472
  %620 = vmatprep.subr.mxu0 0.0
  %621 = vmatpush1.msra.mxu0 0.0
  %622 = vmatprep.subr.mxu0 0.0
  %623 = vmatpush1.msra.mxu0 0.0
  %624 = vmatprep.subr.mxu0 0.0
  %625 = vmatpush1.msra.mxu0 0.0
  %626 = vmatprep.subr.mxu0 0.0
  %627 = vmatpush1.msra.mxu0 0.0
  %628 = vmatprep.subr.mxu0 0.0
  %629 = vmatpush1.msra.mxu0 0.0
  %630 = vmatprep.subr.mxu0 0.0
  %631 = vmatpush1.msra.mxu0 0.0
  %632 = vmatprep.subr.mxu0 0.0
  %633 = vmatpush1.msra.mxu0 0.0
  %634 = vmatprep.subr.mxu0 0.0
  %635 = vmatpush1.msra.mxu0 0.0
  %636 = vmatprep.subr.mxu0 0.0
  %637 = vmatpush1.msra.mxu0 0.0
  %638 = vmatprep.subr.mxu0 0.0
  %639 = vmatpush1.msra.mxu0 0.0
  %640 = vmatprep.subr.mxu0 0.0
  %641 = vmatpush1.msra.mxu0 0.0
  %642 = vmatprep.subr.mxu0 0.0
  %643 = vmatpush1.msra.mxu0 0.0
  %644 = vmatprep.subr.mxu0 0.0
  %645 = vmatpush1.msra.mxu0 0.0
  %646 = vmatprep.subr.mxu0 0.0
  %647 = vmatpush1.msra.mxu0 0.0
  %648 = vmatprep.subr.mxu0 0.0
  %649 = vmatpush1.msra.mxu0 0.0
  %650 = vmatprep.subr.mxu0 0.0
  %651 = vmatpush1.msra.mxu0 0.0
  %652 = vmatprep.subr.mxu0 0.0
  %653 = vmatpush1.msra.mxu0 0.0
  %654 = vmatprep.subr.mxu0 0.0
  %655 = vmatpush1.msra.mxu0 0.0
  %656 = vmatprep.subr.mxu0 0.0
  %657 = vmatpush1.msra.mxu0 0.0
  %658 = vmatprep.subr.mxu0 0.0
  %659 = vmatpush1.msra.mxu0 0.0
  %660 = vmatprep.subr.mxu0 0.0
  %661 = vmatpush1.msra.mxu0 0.0
  %662 = vmatprep.subr.mxu0 0.0
  %663 = vmatpush1.msra.mxu0 0.0
  %664 = vmatprep.subr.mxu0 0.0
  %665 = vmatpush1.msra.mxu0 0.0
  %666 = vmatprep.mubr.f32.mxu0 0.0
  %667 = vmatmul.mubr.f32.gmra.mrb[0].mxu0 %v502
  %v668 = vpop.f32.mrb[0].mxu0
  %v669 = vadd.f32 %v483, %v668
  %v670 = vpop.f32.mrb[0].mxu0
  %v671 = vadd.f32 %v483, %v670
  %672 = vmatprep.mubr.f32.mxu0 0.0
  %673 = vmatmul.mubr.f32.gmra.mrb[0].mxu0 %v505
  %v674 = vpop.f32.mrb[0].mxu0
  %v675 = vadd.f32 %v488, %v674
  %v676 = vpop.f32.mrb[0].mxu0
  %v677 = vadd.f32 %v488, %v676
  %678 = vmatprep.mubr.f32.mxu0 0.0
  %679 = vmatmul.mubr.f32.gmra.mrb[0].mxu0 %v508
  %v680 = vpop.f32.mrb[0].mxu0
  %v681 = vadd.f32 %v493, %v680
  %v682 = vpop.f32.mrb[0].mxu0
  %v683 = vadd.f32 %v493, %v682
  %684 = vmatprep.mubr.f32.mxu0 0.0
  %685 = vmatmul.mubr.f32.gmra.mrb[0].mxu0 %v511
  %v686 = vpop.f32.mrb[0].mxu0
  %v687 = vadd.f32 %v498, %v686
  %v688 = vpop.f32.mrb[0].mxu0
  %v689 = vadd.f32 %v498, %v688
  %690 = vdwg.mxu0
  %691 = vmatprep.subr.mxu0 %v427
  %692 = vmatpush1.msra.mxu0 %v426
  %693 = vmatprep.subr.mxu0 %v433
  %694 = vmatpush1.msra.mxu0 %v432
  %695 = vmatprep.subr.mxu0 %v439
  %696 = vmatpush1.msra.mxu0 %v438
  %697 = vmatprep.subr.mxu0 %v445
  %698 = vmatpush1.msra.mxu0 %v444
  %699 = vmatprep.subr.mxu0 %v451
  %700 = vmatpush1.msra.mxu0 %v450
  %701 = vmatprep.subr.mxu0 %v457
  %702 = vmatpush1.msra.mxu0 %v456
  %703 = vmatprep.subr.mxu0 %v463
  %704 = vmatpush1.msra.mxu0 %v462
  %705 = vmatprep.subr.mxu0 %v469
  %706 = vmatpush1.msra.mxu0 %v468
  %707 = vmatprep.subr.mxu0 %v475
  %708 = vmatpush1.msra.mxu0 %v474
  %709 = vmatprep.subr.mxu0 0.0
  %710 = vmatpush1.msra.mxu0 0.0
  %711 = vmatprep.subr.mxu0 0.0
  %712 = vmatpush1.msra.mxu0 0.0
  %713 = vmatprep.subr.mxu0 0.0
  %714 = vmatpush1.msra.mxu0 0.0
  %715 = vmatprep.subr.mxu0 0.0
  %716 = vmatpush1.msra.mxu0 0.0
  %717 = vmatprep.subr.mxu0 0.0
  %718 = vmatpush1.msra.mxu0 0.0
  %719 = vmatprep.subr.mxu0 0.0
  %720 = vmatpush1.msra.mxu0 0.0
  %721 = vmatprep.subr.mxu0 0.0
  %722 = vmatpush1.msra.mxu0 0.0
  %723 = vmatprep.subr.mxu0 0.0
  %724 = vmatpush1.msra.mxu0 0.0
  %725 = vmatprep.subr.mxu0 0.0
  %726 = vmatpush1.msra.mxu0 0.0
  %727 = vmatprep.subr.mxu0 0.0
  %728 = vmatpush1.msra.mxu0 0.0
  %729 = vmatprep.subr.mxu0 0.0
  %730 = vmatpush1.msra.mxu0 0.0
  %731 = vmatprep.subr.mxu0 0.0
  %732 = vmatpush1.msra.mxu0 0.0
  %733 = vmatprep.subr.mxu0 0.0
  %734 = vmatpush1.msra.mxu0 0.0
  %735 = vmatprep.subr.mxu0 0.0
  %736 = vmatpush1.msra.mxu0 0.0
  %737 = vmatprep.subr.mxu0 0.0
  %738 = vmatpush1.msra.mxu0 0.0
  %739 = vmatprep.subr.mxu0 0.0
  %740 = vmatpush1.msra.mxu0 0.0
  %741 = vmatprep.subr.mxu0 0.0
  %742 = vmatpush1.msra.mxu0 0.0
  %743 = vmatprep.subr.mxu0 0.0
  %744 = vmatpush1.msra.mxu0 0.0
  %745 = vmatprep.subr.mxu0 0.0
  %746 = vmatpush1.msra.mxu0 0.0
  %747 = vmatprep.subr.mxu0 0.0
  %748 = vmatpush1.msra.mxu0 0.0
  %749 = vmatprep.subr.mxu0 0.0
  %750 = vmatpush1.msra.mxu0 0.0
  %751 = vmatprep.subr.mxu0 0.0
  %752 = vmatpush1.msra.mxu0 0.0
  %753 = vmatprep.subr.mxu0 0.0
  %754 = vmatpush1.msra.mxu0 0.0
  %755 = vmatprep.mubr.f32.mxu0 0.0
  %756 = vmatmul.mubr.f32.gmra.mrb[0].mxu0 %v502
  %v757 = vpop.f32.mrb[0].mxu0
  %v758 = vadd.f32 %v483, %v757
  %v759 = vpop.f32.mrb[0].mxu0
  %v760 = vadd.f32 %v483, %v759
  %761 = vmatprep.mubr.f32.mxu0 0.0
  %762 = vmatmul.mubr.f32.gmra.mrb[0].mxu0 %v505
  %v763 = vpop.f32.mrb[0].mxu0
  %v764 = vadd.f32 %v488, %v763
  %v765 = vpop.f32.mrb[0].mxu0
  %v766 = vadd.f32 %v488, %v765
  %767 = vmatprep.mubr.f32.mxu0 0.0
  %768 = vmatmul.mubr.f32.gmra.mrb[0].mxu0 %v508
  %v769 = vpop.f32.mrb[0].mxu0
  %v770 = vadd.f32 %v493, %v769
  %v771 = vpop.f32.mrb[0].mxu0
  %v772 = vadd.f32 %v493, %v771
  %773 = vmatprep.mubr.f32.mxu0 0.0
  %774 = vmatmul.mubr.f32.gmra.mrb[0].mxu0 %v511
  %v775 = vpop.f32.mrb[0].mxu0
  %v776 = vadd.f32 %v498, %v775
  %v777 = vpop.f32.mrb[0].mxu0
  %v778 = vadd.f32 %v498, %v777
  %779 = vdwg.mxu0
  %v781 = vlaneseq
  %v782 = vshrl.u32 %v781, 7
  %v783 = vsub.s32 0, %v782
  %v784 = vrot.slane %v29, %v783
  %v785 = vlaneseq
  %v786 = vshrl.u32 %v785, 7
  %v787 = vsub.s32 1, %v786
  %v788 = vrot.slane %v29, %v787
  %v789 = vlaneseq
  %v790 = vshrl.u32 %v789, 7
  %v791 = vsub.s32 2, %v790
  %v792 = vrot.slane %v29, %v791
  %v793 = vlaneseq
  %v794 = vshrl.u32 %v793, 7
  %v795 = vsub.s32 3, %v794
  %v796 = vrot.slane %v29, %v795
  %v797 = vlaneseq
  %v798 = vshrl.u32 %v797, 7
  %v799 = vsub.s32 4, %v798
  %v800 = vrot.slane %v29, %v799
  %v801 = vlaneseq
  %v802 = vshrl.u32 %v801, 7
  %v803 = vsub.s32 5, %v802
  %v804 = vrot.slane %v29, %v803
  %v811 = vmul.f32 %v580, %v784
  %v812 = vmul.f32 %v582, %v788
  %v813 = vmul.f32 %v669, %v792
  %v814 = vmul.f32 %v671, %v796
  %v815 = vmul.f32 %v758, %v800
  %v816 = vmul.f32 %v760, %v804
  %v817 = vmul.f32 %v586, %v784
  %v818 = vmul.f32 %v588, %v788
  %v819 = vmul.f32 %v675, %v792
  %v820 = vmul.f32 %v677, %v796
  %v821 = vmul.f32 %v764, %v800
  %v822 = vmul.f32 %v766, %v804
  %v823 = vmul.f32 %v592, %v784
  %v824 = vmul.f32 %v594, %v788
  %v825 = vmul.f32 %v681, %v792
  %v826 = vmul.f32 %v683, %v796
  %v827 = vmul.f32 %v770, %v800
  %v828 = vmul.f32 %v772, %v804
  %v829 = vmul.f32 %v598, %v784
  %v830 = vmul.f32 %v600, %v788
  %v831 = vmul.f32 %v687, %v792
  %v832 = vmul.f32 %v689, %v796
  %v833 = vmul.f32 %v776, %v800
  %v834 = vmul.f32 %v778, %v804
  %835 = vst [vmem:[#allocation2] sm:$0xff] 0.0
  %836 = vst [vmem:[#allocation2 + $0x38] sm:$0xff] 0.0
  %837 = vst [vmem:[#allocation2 + $0x8] sm:$0xff] %v811
  %838 = vst [vmem:[#allocation2 + $0x10] sm:$0xff] %v812
  %839 = vst [vmem:[#allocation2 + $0x18] sm:$0xff] %v813
  %840 = vst [vmem:[#allocation2 + $0x20] sm:$0xff] %v814
  %841 = vst [vmem:[#allocation2 + $0x28] sm:$0xff] %v815
  %842 = vst [vmem:[#allocation2 + $0x30] sm:$0xff] %v816
  %s843 = scalar_lea.vmem [#allocation2], 64
  %844 = vst [vmem:[%s843] sm:$0xff] 0.0
  %845 = vst [vmem:[%s843 + $0x38] sm:$0xff] 0.0
  %846 = vst [vmem:[%s843 + $0x8] sm:$0xff] %v817
  %847 = vst [vmem:[%s843 + $0x10] sm:$0xff] %v818
  %848 = vst [vmem:[%s843 + $0x18] sm:$0xff] %v819
  %849 = vst [vmem:[%s843 + $0x20] sm:$0xff] %v820
  %850 = vst [vmem:[%s843 + $0x28] sm:$0xff] %v821
  %851 = vst [vmem:[%s843 + $0x30] sm:$0xff] %v822
  %s852 = scalar_lea.vmem [#allocation2], 128
  %853 = vst [vmem:[%s852] sm:$0xff] 0.0
  %854 = vst [vmem:[%s852 + $0x38] sm:$0xff] 0.0
  %855 = vst [vmem:[%s852 + $0x8] sm:$0xff] %v823
  %856 = vst [vmem:[%s852 + $0x10] sm:$0xff] %v824
  %857 = vst [vmem:[%s852 + $0x18] sm:$0xff] %v825
  %858 = vst [vmem:[%s852 + $0x20] sm:$0xff] %v826
  %859 = vst [vmem:[%s852 + $0x28] sm:$0xff] %v827
  %860 = vst [vmem:[%s852 + $0x30] sm:$0xff] %v828
  %s861 = scalar_lea.vmem [#allocation2], 192
  %862 = vst [vmem:[%s861] sm:$0xff] 0.0
  %863 = vst [vmem:[%s861 + $0x38] sm:$0xff] 0.0
  %864 = vst [vmem:[%s861 + $0x8] sm:$0xff] %v829
  %865 = vst [vmem:[%s861 + $0x10] sm:$0xff] %v830
  %866 = vst [vmem:[%s861 + $0x18] sm:$0xff] %v831
  %867 = vst [vmem:[%s861 + $0x20] sm:$0xff] %v832
  %868 = vst [vmem:[%s861 + $0x28] sm:$0xff] %v833
  %869 = vst [vmem:[%s861 + $0x30] sm:$0xff] %v834
  %v870 = vld [vmem:[#allocation2 + $0x8] sm:$0xff]
  %v871 = vld [vmem:[#allocation2 + $0x10] sm:$0xff]
  %v872 = vld [vmem:[#allocation2 + $0x18] sm:$0xff]
  %v873 = vld [vmem:[#allocation2 + $0x20] sm:$0xff]
  %v874 = vld [vmem:[#allocation2 + $0x28] sm:$0xff]
  %v875 = vld [vmem:[#allocation2 + $0x30] sm:$0xff]
  %876 = vst [vmem:[#allocation4] sm:$0xff] %v870
  %877 = vst [vmem:[#allocation4 + $0x8] sm:$0xff] %v871
  %878 = vst [vmem:[#allocation4 + $0x10] sm:$0xff] %v872
  %879 = vst [vmem:[#allocation4 + $0x18] sm:$0xff] %v873
  %880 = vst [vmem:[#allocation4 + $0x20] sm:$0xff] %v874
  %881 = vst [vmem:[#allocation4 + $0x28] sm:$0xff] %v875
  %v882 = vld [vmem:[#allocation2 + $0x8] sm:$0xff]
  %v883 = vld [vmem:[#allocation2 + $0x10] sm:$0xff]
  %v884 = vld [vmem:[#allocation2 + $0x18] sm:$0xff]
  %v885 = vld [vmem:[#allocation2 + $0x20] sm:$0xff]
  %v886 = vld [vmem:[#allocation2 + $0x28] sm:$0xff]
  %v887 = vld [vmem:[#allocation2 + $0x30] sm:$0xff]
  %v888 = vld [vmem:[#allocation2 + $0x38] sm:$0xff]
  %896 = vrot.lane.b32.xlu0 %v882, 127
  %v897 = vpop.permute.xlu0 %896
  %898 = vrot.lane.b32.xlu0 %v883, 127
  %v899 = vpop.permute.xlu0 %898
  %900 = vrot.lane.b32.xlu0 %v884, 127
  %v901 = vpop.permute.xlu0 %900
  %902 = vrot.lane.b32.xlu0 %v885, 127
  %v903 = vpop.permute.xlu0 %902
  %904 = vrot.lane.b32.xlu0 %v886, 127
  %v905 = vpop.permute.xlu0 %904
  %906 = vrot.lane.b32.xlu0 %v887, 127
  %v907 = vpop.permute.xlu0 %906
  %908 = vrot.lane.b32.xlu0 %v888, 127
  %v909 = vpop.permute.xlu0 %908
  %v910 = vsel %vm70, %v897, %v899
  %v911 = vsel %vm70, %v899, %v901
  %v912 = vsel %vm70, %v901, %v903
  %v913 = vsel %vm70, %v903, %v905
  %v914 = vsel %vm70, %v905, %v907
  %v915 = vsel %vm70, %v907, %v909
  %922 = vst [vmem:[#allocation4 + $0x30] sm:$0xff] %v910
  %923 = vst [vmem:[#allocation4 + $0x38] sm:$0xff] %v911
  %924 = vst [vmem:[#allocation4 + $0x40] sm:$0xff] %v912
  %925 = vst [vmem:[#allocation4 + $0x48] sm:$0xff] %v913
  %926 = vst [vmem:[#allocation4 + $0x50] sm:$0xff] %v914
  %927 = vst [vmem:[#allocation4 + $0x58] sm:$0xff] %v915
  %v928 = vld [vmem:[#allocation2 + $0x8] sm:$0xff]
  %v929 = vld [vmem:[#allocation2 + $0x10] sm:$0xff]
  %v930 = vld [vmem:[#allocation2 + $0x18] sm:$0xff]
  %v931 = vld [vmem:[#allocation2 + $0x20] sm:$0xff]
  %v932 = vld [vmem:[#allocation2 + $0x28] sm:$0xff]
  %v933 = vld [vmem:[#allocation2 + $0x30] sm:$0xff]
  %v934 = vld [vmem:[#allocation2 + $0x38] sm:$0xff]
  %942 = vrot.lane.b32.xlu0 %v928, 110
  %v943 = vpop.permute.xlu0 %942
  %944 = vrot.lane.b32.xlu0 %v929, 110
  %v945 = vpop.permute.xlu0 %944
  %946 = vrot.lane.b32.xlu0 %v930, 110
  %v947 = vpop.permute.xlu0 %946
  %948 = vrot.lane.b32.xlu0 %v931, 110
  %v949 = vpop.permute.xlu0 %948
  %950 = vrot.lane.b32.xlu0 %v932, 110
  %v951 = vpop.permute.xlu0 %950
  %952 = vrot.lane.b32.xlu0 %v933, 110
  %v953 = vpop.permute.xlu0 %952
  %954 = vrot.lane.b32.xlu0 %v934, 110
  %v955 = vpop.permute.xlu0 %954
  %v956 = vsel %vm164, %v943, %v945
  %v957 = vsel %vm164, %v945, %v947
  %v958 = vsel %vm164, %v947, %v949
  %v959 = vsel %vm164, %v949, %v951
  %v960 = vsel %vm164, %v951, %v953
  %v961 = vsel %vm164, %v953, %v955
  %968 = vst [vmem:[#allocation4 + $0x60] sm:$0xff] %v956
  %969 = vst [vmem:[#allocation4 + $0x68] sm:$0xff] %v957
  %970 = vst [vmem:[#allocation4 + $0x70] sm:$0xff] %v958
  %971 = vst [vmem:[#allocation4 + $0x78] sm:$0xff] %v959
  %972 = vst [vmem:[#allocation4 + $0x80] sm:$0xff] %v960
  %973 = vst [vmem:[#allocation4 + $0x88] sm:$0xff] %v961
  %v974 = vld [vmem:[#allocation2 + $0x8] sm:$0xff]
  %v975 = vld [vmem:[#allocation2 + $0x10] sm:$0xff]
  %v976 = vld [vmem:[#allocation2 + $0x18] sm:$0xff]
  %v977 = vld [vmem:[#allocation2 + $0x20] sm:$0xff]
  %v978 = vld [vmem:[#allocation2 + $0x28] sm:$0xff]
  %v979 = vld [vmem:[#allocation2 + $0x30] sm:$0xff]
  %v980 = vld [vmem:[#allocation2 + $0x38] sm:$0xff]
  %988 = vrot.lane.b32.xlu0 %v974, 109
  %v989 = vpop.permute.xlu0 %988
  %990 = vrot.lane.b32.xlu0 %v975, 109
  %v991 = vpop.permute.xlu0 %990
  %992 = vrot.lane.b32.xlu0 %v976, 109
  %v993 = vpop.permute.xlu0 %992
  %994 = vrot.lane.b32.xlu0 %v977, 109
  %v995 = vpop.permute.xlu0 %994
  %996 = vrot.lane.b32.xlu0 %v978, 109
  %v997 = vpop.permute.xlu0 %996
  %998 = vrot.lane.b32.xlu0 %v979, 109
  %v999 = vpop.permute.xlu0 %998
  %1000 = vrot.lane.b32.xlu0 %v980, 109
  %v1001 = vpop.permute.xlu0 %1000
  %v1002 = vsel %vm211, %v989, %v991
  %v1003 = vsel %vm211, %v991, %v993
  %v1004 = vsel %vm211, %v993, %v995
  %v1005 = vsel %vm211, %v995, %v997
  %v1006 = vsel %vm211, %v997, %v999
  %v1007 = vsel %vm211, %v999, %v1001
  %1014 = vst [vmem:[#allocation4 + $0x90] sm:$0xff] %v1002
  %1015 = vst [vmem:[#allocation4 + $0x98] sm:$0xff] %v1003
  %1016 = vst [vmem:[#allocation4 + $0xa0] sm:$0xff] %v1004
  %1017 = vst [vmem:[#allocation4 + $0xa8] sm:$0xff] %v1005
  %1018 = vst [vmem:[#allocation4 + $0xb0] sm:$0xff] %v1006
  %1019 = vst [vmem:[#allocation4 + $0xb8] sm:$0xff] %v1007
  %v1020 = vld [vmem:[%s843] sm:$0xff]
  %v1021 = vld [vmem:[%s843 + $0x8] sm:$0xff]
  %v1022 = vld [vmem:[%s843 + $0x10] sm:$0xff]
  %v1023 = vld [vmem:[%s843 + $0x18] sm:$0xff]
  %v1024 = vld [vmem:[%s843 + $0x20] sm:$0xff]
  %v1025 = vld [vmem:[%s843 + $0x28] sm:$0xff]
  %v1026 = vld [vmem:[%s843 + $0x30] sm:$0xff]
  %1034 = vrot.lane.b32.xlu0 %v1020, 1
  %v1035 = vpop.permute.xlu0 %1034
  %1036 = vrot.lane.b32.xlu0 %v1021, 1
  %v1037 = vpop.permute.xlu0 %1036
  %1038 = vrot.lane.b32.xlu0 %v1022, 1
  %v1039 = vpop.permute.xlu0 %1038
  %1040 = vrot.lane.b32.xlu0 %v1023, 1
  %v1041 = vpop.permute.xlu0 %1040
  %1042 = vrot.lane.b32.xlu0 %v1024, 1
  %v1043 = vpop.permute.xlu0 %1042
  %1044 = vrot.lane.b32.xlu0 %v1025, 1
  %v1045 = vpop.permute.xlu0 %1044
  %1046 = vrot.lane.b32.xlu0 %v1026, 1
  %v1047 = vpop.permute.xlu0 %1046
  %vm1048 = vcmask 7168
  %v1049 = vsel %vm1048, %v1035, %v1037
  %v1050 = vsel %vm1048, %v1037, %v1039
  %v1051 = vsel %vm1048, %v1039, %v1041
  %v1052 = vsel %vm1048, %v1041, %v1043
  %v1053 = vsel %vm1048, %v1043, %v1045
  %v1054 = vsel %vm1048, %v1045, %v1047
  %1061 = vst [vmem:[#allocation4 + $0xc0] sm:$0xff] %v1049
  %1062 = vst [vmem:[#allocation4 + $0xc8] sm:$0xff] %v1050
  %1063 = vst [vmem:[#allocation4 + $0xd0] sm:$0xff] %v1051
  %1064 = vst [vmem:[#allocation4 + $0xd8] sm:$0xff] %v1052
  %1065 = vst [vmem:[#allocation4 + $0xe0] sm:$0xff] %v1053
  %1066 = vst [vmem:[#allocation4 + $0xe8] sm:$0xff] %v1054
  %v1067 = vld [vmem:[%s843 + $0x8] sm:$0xff]
  %v1068 = vld [vmem:[%s843 + $0x10] sm:$0xff]
  %v1069 = vld [vmem:[%s843 + $0x18] sm:$0xff]
  %v1070 = vld [vmem:[%s843 + $0x20] sm:$0xff]
  %v1071 = vld [vmem:[%s843 + $0x28] sm:$0xff]
  %v1072 = vld [vmem:[%s843 + $0x30] sm:$0xff]
  %1073 = vst [vmem:[#allocation4 + $0xf0] sm:$0xff] %v1067
  %1074 = vst [vmem:[#allocation4 + $0xf8] sm:$0xff] %v1068
  %1075 = vst [vmem:[#allocation4 + $0x100] sm:$0xff] %v1069
  %1076 = vst [vmem:[#allocation4 + $0x108] sm:$0xff] %v1070
  %1077 = vst [vmem:[#allocation4 + $0x110] sm:$0xff] %v1071
  %1078 = vst [vmem:[#allocation4 + $0x118] sm:$0xff] %v1072
  %v1079 = vld [vmem:[%s843 + $0x8] sm:$0xff]
  %v1080 = vld [vmem:[%s843 + $0x10] sm:$0xff]
  %v1081 = vld [vmem:[%s843 + $0x18] sm:$0xff]
  %v1082 = vld [vmem:[%s843 + $0x20] sm:$0xff]
  %v1083 = vld [vmem:[%s843 + $0x28] sm:$0xff]
  %v1084 = vld [vmem:[%s843 + $0x30] sm:$0xff]
  %v1085 = vld [vmem:[%s843 + $0x38] sm:$0xff]
  %1093 = vrot.lane.b32.xlu0 %v1079, 111
  %v1094 = vpop.permute.xlu0 %1093
  %1095 = vrot.lane.b32.xlu0 %v1080, 111
  %v1096 = vpop.permute.xlu0 %1095
  %1097 = vrot.lane.b32.xlu0 %v1081, 111
  %v1098 = vpop.permute.xlu0 %1097
  %1099 = vrot.lane.b32.xlu0 %v1082, 111
  %v1100 = vpop.permute.xlu0 %1099
  %1101 = vrot.lane.b32.xlu0 %v1083, 111
  %v1102 = vpop.permute.xlu0 %1101
  %1103 = vrot.lane.b32.xlu0 %v1084, 111
  %v1104 = vpop.permute.xlu0 %1103
  %1105 = vrot.lane.b32.xlu0 %v1085, 111
  %v1106 = vpop.permute.xlu0 %1105
  %vm1107 = vcmask 908288
  %v1108 = vsel %vm1107, %v1094, %v1096
  %v1109 = vsel %vm1107, %v1096, %v1098
  %v1110 = vsel %vm1107, %v1098, %v1100
  %v1111 = vsel %vm1107, %v1100, %v1102
  %v1112 = vsel %vm1107, %v1102, %v1104
  %v1113 = vsel %vm1107, %v1104, %v1106
  %1120 = vst [vmem:[#allocation4 + $0x120] sm:$0xff] %v1108
  %1121 = vst [vmem:[#allocation4 + $0x128] sm:$0xff] %v1109
  %1122 = vst [vmem:[#allocation4 + $0x130] sm:$0xff] %v1110
  %1123 = vst [vmem:[#allocation4 + $0x138] sm:$0xff] %v1111
  %1124 = vst [vmem:[#allocation4 + $0x140] sm:$0xff] %v1112
  %1125 = vst [vmem:[#allocation4 + $0x148] sm:$0xff] %v1113
  %v1126 = vld [vmem:[%s843 + $0x8] sm:$0xff]
  %v1127 = vld [vmem:[%s843 + $0x10] sm:$0xff]
  %v1128 = vld [vmem:[%s843 + $0x18] sm:$0xff]
  %v1129 = vld [vmem:[%s843 + $0x20] sm:$0xff]
  %v1130 = vld [vmem:[%s843 + $0x28] sm:$0xff]
  %v1131 = vld [vmem:[%s843 + $0x30] sm:$0xff]
  %v1132 = vld [vmem:[%s843 + $0x38] sm:$0xff]
  %1140 = vrot.lane.b32.xlu0 %v1126, 110
  %v1141 = vpop.permute.xlu0 %1140
  %1142 = vrot.lane.b32.xlu0 %v1127, 110
  %v1143 = vpop.permute.xlu0 %1142
  %1144 = vrot.lane.b32.xlu0 %v1128, 110
  %v1145 = vpop.permute.xlu0 %1144
  %1146 = vrot.lane.b32.xlu0 %v1129, 110
  %v1147 = vpop.permute.xlu0 %1146
  %1148 = vrot.lane.b32.xlu0 %v1130, 110
  %v1149 = vpop.permute.xlu0 %1148
  %1150 = vrot.lane.b32.xlu0 %v1131, 110
  %v1151 = vpop.permute.xlu0 %1150
  %1152 = vrot.lane.b32.xlu0 %v1132, 110
  %v1153 = vpop.permute.xlu0 %1152
  %v1154 = vsel %vm164, %v1141, %v1143
  %v1155 = vsel %vm164, %v1143, %v1145
  %v1156 = vsel %vm164, %v1145, %v1147
  %v1157 = vsel %vm164, %v1147, %v1149
  %v1158 = vsel %vm164, %v1149, %v1151
  %v1159 = vsel %vm164, %v1151, %v1153
  %1166 = vst [vmem:[#allocation4 + $0x150] sm:$0xff] %v1154
  %1167 = vst [vmem:[#allocation4 + $0x158] sm:$0xff] %v1155
  %1168 = vst [vmem:[#allocation4 + $0x160] sm:$0xff] %v1156
  %1169 = vst [vmem:[#allocation4 + $0x168] sm:$0xff] %v1157
  %1170 = vst [vmem:[#allocation4 + $0x170] sm:$0xff] %v1158
  %1171 = vst [vmem:[#allocation4 + $0x178] sm:$0xff] %v1159
  %v1172 = vld [vmem:[%s852] sm:$0xff]
  %v1173 = vld [vmem:[%s852 + $0x8] sm:$0xff]
  %v1174 = vld [vmem:[%s852 + $0x10] sm:$0xff]
  %v1175 = vld [vmem:[%s852 + $0x18] sm:$0xff]
  %v1176 = vld [vmem:[%s852 + $0x20] sm:$0xff]
  %v1177 = vld [vmem:[%s852 + $0x28] sm:$0xff]
  %v1178 = vld [vmem:[%s852 + $0x30] sm:$0xff]
  %1186 = vrot.lane.b32.xlu0 %v1172, 18
  %v1187 = vpop.permute.xlu0 %1186
  %1188 = vrot.lane.b32.xlu0 %v1173, 18
  %v1189 = vpop.permute.xlu0 %1188
  %1190 = vrot.lane.b32.xlu0 %v1174, 18
  %v1191 = vpop.permute.xlu0 %1190
  %1192 = vrot.lane.b32.xlu0 %v1175, 18
  %v1193 = vpop.permute.xlu0 %1192
  %1194 = vrot.lane.b32.xlu0 %v1176, 18
  %v1195 = vpop.permute.xlu0 %1194
  %1196 = vrot.lane.b32.xlu0 %v1177, 18
  %v1197 = vpop.permute.xlu0 %1196
  %1198 = vrot.lane.b32.xlu0 %v1178, 18
  %v1199 = vpop.permute.xlu0 %1198
  %vm1200 = vcmask 146432
  %v1201 = vsel %vm1200, %v1187, %v1189
  %v1202 = vsel %vm1200, %v1189, %v1191
  %v1203 = vsel %vm1200, %v1191, %v1193
  %v1204 = vsel %vm1200, %v1193, %v1195
  %v1205 = vsel %vm1200, %v1195, %v1197
  %v1206 = vsel %vm1200, %v1197, %v1199
  %1213 = vst [vmem:[#allocation4 + $0x180] sm:$0xff] %v1201
  %1214 = vst [vmem:[#allocation4 + $0x188] sm:$0xff] %v1202
  %1215 = vst [vmem:[#allocation4 + $0x190] sm:$0xff] %v1203
  %1216 = vst [vmem:[#allocation4 + $0x198] sm:$0xff] %v1204
  %1217 = vst [vmem:[#allocation4 + $0x1a0] sm:$0xff] %v1205
  %1218 = vst [vmem:[#allocation4 + $0x1a8] sm:$0xff] %v1206
  %v1219 = vld [vmem:[%s852] sm:$0xff]
  %v1220 = vld [vmem:[%s852 + $0x8] sm:$0xff]
  %v1221 = vld [vmem:[%s852 + $0x10] sm:$0xff]
  %v1222 = vld [vmem:[%s852 + $0x18] sm:$0xff]
  %v1223 = vld [vmem:[%s852 + $0x20] sm:$0xff]
  %v1224 = vld [vmem:[%s852 + $0x28] sm:$0xff]
  %v1225 = vld [vmem:[%s852 + $0x30] sm:$0xff]
  %1233 = vrot.lane.b32.xlu0 %v1219, 17
  %v1234 = vpop.permute.xlu0 %1233
  %1235 = vrot.lane.b32.xlu0 %v1220, 17
  %v1236 = vpop.permute.xlu0 %1235
  %1237 = vrot.lane.b32.xlu0 %v1221, 17
  %v1238 = vpop.permute.xlu0 %1237
  %1239 = vrot.lane.b32.xlu0 %v1222, 17
  %v1240 = vpop.permute.xlu0 %1239
  %1241 = vrot.lane.b32.xlu0 %v1223, 17
  %v1242 = vpop.permute.xlu0 %1241
  %1243 = vrot.lane.b32.xlu0 %v1224, 17
  %v1244 = vpop.permute.xlu0 %1243
  %1245 = vrot.lane.b32.xlu0 %v1225, 17
  %v1246 = vpop.permute.xlu0 %1245
  %vm1247 = vcmask 138240
  %v1248 = vsel %vm1247, %v1234, %v1236
  %v1249 = vsel %vm1247, %v1236, %v1238
  %v1250 = vsel %vm1247, %v1238, %v1240
  %v1251 = vsel %vm1247, %v1240, %v1242
  %v1252 = vsel %vm1247, %v1242, %v1244
  %v1253 = vsel %vm1247, %v1244, %v1246
  %1260 = vst [vmem:[#allocation4 + $0x1b0] sm:$0xff] %v1248
  %1261 = vst [vmem:[#allocation4 + $0x1b8] sm:$0xff] %v1249
  %1262 = vst [vmem:[#allocation4 + $0x1c0] sm:$0xff] %v1250
  %1263 = vst [vmem:[#allocation4 + $0x1c8] sm:$0xff] %v1251
  %1264 = vst [vmem:[#allocation4 + $0x1d0] sm:$0xff] %v1252
  %1265 = vst [vmem:[#allocation4 + $0x1d8] sm:$0xff] %v1253
  %v1266 = vld [vmem:[%s852 + $0x8] sm:$0xff]
  %v1267 = vld [vmem:[%s852 + $0x10] sm:$0xff]
  %v1268 = vld [vmem:[%s852 + $0x18] sm:$0xff]
  %v1269 = vld [vmem:[%s852 + $0x20] sm:$0xff]
  %v1270 = vld [vmem:[%s852 + $0x28] sm:$0xff]
  %v1271 = vld [vmem:[%s852 + $0x30] sm:$0xff]
  %1272 = vst [vmem:[#allocation4 + $0x1e0] sm:$0xff] %v1266
  %1273 = vst [vmem:[#allocation4 + $0x1e8] sm:$0xff] %v1267
  %1274 = vst [vmem:[#allocation4 + $0x1f0] sm:$0xff] %v1268
  %1275 = vst [vmem:[#allocation4 + $0x1f8] sm:$0xff] %v1269
  %1276 = vst [vmem:[#allocation4 + $0x200] sm:$0xff] %v1270
  %1277 = vst [vmem:[#allocation4 + $0x208] sm:$0xff] %v1271
  %v1278 = vld [vmem:[%s852 + $0x8] sm:$0xff]
  %v1279 = vld [vmem:[%s852 + $0x10] sm:$0xff]
  %v1280 = vld [vmem:[%s852 + $0x18] sm:$0xff]
  %v1281 = vld [vmem:[%s852 + $0x20] sm:$0xff]
  %v1282 = vld [vmem:[%s852 + $0x28] sm:$0xff]
  %v1283 = vld [vmem:[%s852 + $0x30] sm:$0xff]
  %v1284 = vld [vmem:[%s852 + $0x38] sm:$0xff]
  %1292 = vrot.lane.b32.xlu0 %v1278, 127
  %v1293 = vpop.permute.xlu0 %1292
  %1294 = vrot.lane.b32.xlu0 %v1279, 127
  %v1295 = vpop.permute.xlu0 %1294
  %1296 = vrot.lane.b32.xlu0 %v1280, 127
  %v1297 = vpop.permute.xlu0 %1296
  %1298 = vrot.lane.b32.xlu0 %v1281, 127
  %v1299 = vpop.permute.xlu0 %1298
  %1300 = vrot.lane.b32.xlu0 %v1282, 127
  %v1301 = vpop.permute.xlu0 %1300
  %1302 = vrot.lane.b32.xlu0 %v1283, 127
  %v1303 = vpop.permute.xlu0 %1302
  %1304 = vrot.lane.b32.xlu0 %v1284, 127
  %v1305 = vpop.permute.xlu0 %1304
  %v1306 = vsel %vm70, %v1293, %v1295
  %v1307 = vsel %vm70, %v1295, %v1297
  %v1308 = vsel %vm70, %v1297, %v1299
  %v1309 = vsel %vm70, %v1299, %v1301
  %v1310 = vsel %vm70, %v1301, %v1303
  %v1311 = vsel %vm70, %v1303, %v1305
  %1318 = vst [vmem:[#allocation4 + $0x210] sm:$0xff] %v1306
  %1319 = vst [vmem:[#allocation4 + $0x218] sm:$0xff] %v1307
  %1320 = vst [vmem:[#allocation4 + $0x220] sm:$0xff] %v1308
  %1321 = vst [vmem:[#allocation4 + $0x228] sm:$0xff] %v1309
  %1322 = vst [vmem:[#allocation4 + $0x230] sm:$0xff] %v1310
  %1323 = vst [vmem:[#allocation4 + $0x238] sm:$0xff] %v1311
  %v1324 = vld [vmem:[%s861] sm:$0xff]
  %v1325 = vld [vmem:[%s861 + $0x8] sm:$0xff]
  %v1326 = vld [vmem:[%s861 + $0x10] sm:$0xff]
  %v1327 = vld [vmem:[%s861 + $0x18] sm:$0xff]
  %v1328 = vld [vmem:[%s861 + $0x20] sm:$0xff]
  %v1329 = vld [vmem:[%s861 + $0x28] sm:$0xff]
  %v1330 = vld [vmem:[%s861 + $0x30] sm:$0xff]
  %1338 = vrot.lane.b32.xlu0 %v1324, 19
  %v1339 = vpop.permute.xlu0 %1338
  %1340 = vrot.lane.b32.xlu0 %v1325, 19
  %v1341 = vpop.permute.xlu0 %1340
  %1342 = vrot.lane.b32.xlu0 %v1326, 19
  %v1343 = vpop.permute.xlu0 %1342
  %1344 = vrot.lane.b32.xlu0 %v1327, 19
  %v1345 = vpop.permute.xlu0 %1344
  %1346 = vrot.lane.b32.xlu0 %v1328, 19
  %v1347 = vpop.permute.xlu0 %1346
  %1348 = vrot.lane.b32.xlu0 %v1329, 19
  %v1349 = vpop.permute.xlu0 %1348
  %1350 = vrot.lane.b32.xlu0 %v1330, 19
  %v1351 = vpop.permute.xlu0 %1350
  %vm1352 = vcmask 154624
  %v1353 = vsel %vm1352, %v1339, %v1341
  %v1354 = vsel %vm1352, %v1341, %v1343
  %v1355 = vsel %vm1352, %v1343, %v1345
  %v1356 = vsel %vm1352, %v1345, %v1347
  %v1357 = vsel %vm1352, %v1347, %v1349
  %v1358 = vsel %vm1352, %v1349, %v1351
  %1365 = vst [vmem:[#allocation4 + $0x240] sm:$0xff] %v1353
  %1366 = vst [vmem:[#allocation4 + $0x248] sm:$0xff] %v1354
  %1367 = vst [vmem:[#allocation4 + $0x250] sm:$0xff] %v1355
  %1368 = vst [vmem:[#allocation4 + $0x258] sm:$0xff] %v1356
  %1369 = vst [vmem:[#allocation4 + $0x260] sm:$0xff] %v1357
  %1370 = vst [vmem:[#allocation4 + $0x268] sm:$0xff] %v1358
  %v1371 = vld [vmem:[%s861] sm:$0xff]
  %v1372 = vld [vmem:[%s861 + $0x8] sm:$0xff]
  %v1373 = vld [vmem:[%s861 + $0x10] sm:$0xff]
  %v1374 = vld [vmem:[%s861 + $0x18] sm:$0xff]
  %v1375 = vld [vmem:[%s861 + $0x20] sm:$0xff]
  %v1376 = vld [vmem:[%s861 + $0x28] sm:$0xff]
  %v1377 = vld [vmem:[%s861 + $0x30] sm:$0xff]
  %1385 = vrot.lane.b32.xlu0 %v1371, 18
  %v1386 = vpop.permute.xlu0 %1385
  %1387 = vrot.lane.b32.xlu0 %v1372, 18
  %v1388 = vpop.permute.xlu0 %1387
  %1389 = vrot.lane.b32.xlu0 %v1373, 18
  %v1390 = vpop.permute.xlu0 %1389
  %1391 = vrot.lane.b32.xlu0 %v1374, 18
  %v1392 = vpop.permute.xlu0 %1391
  %1393 = vrot.lane.b32.xlu0 %v1375, 18
  %v1394 = vpop.permute.xlu0 %1393
  %1395 = vrot.lane.b32.xlu0 %v1376, 18
  %v1396 = vpop.permute.xlu0 %1395
  %1397 = vrot.lane.b32.xlu0 %v1377, 18
  %v1398 = vpop.permute.xlu0 %1397
  %v1399 = vsel %vm1200, %v1386, %v1388
  %v1400 = vsel %vm1200, %v1388, %v1390
  %v1401 = vsel %vm1200, %v1390, %v1392
  %v1402 = vsel %vm1200, %v1392, %v1394
  %v1403 = vsel %vm1200, %v1394, %v1396
  %v1404 = vsel %vm1200, %v1396, %v1398
  %1411 = vst [vmem:[#allocation4 + $0x270] sm:$0xff] %v1399
  %1412 = vst [vmem:[#allocation4 + $0x278] sm:$0xff] %v1400
  %1413 = vst [vmem:[#allocation4 + $0x280] sm:$0xff] %v1401
  %1414 = vst [vmem:[#allocation4 + $0x288] sm:$0xff] %v1402
  %1415 = vst [vmem:[#allocation4 + $0x290] sm:$0xff] %v1403
  %1416 = vst [vmem:[#allocation4 + $0x298] sm:$0xff] %v1404
  %v1417 = vld [vmem:[%s861] sm:$0xff]
  %v1418 = vld [vmem:[%s861 + $0x8] sm:$0xff]
  %v1419 = vld [vmem:[%s861 + $0x10] sm:$0xff]
  %v1420 = vld [vmem:[%s861 + $0x18] sm:$0xff]
  %v1421 = vld [vmem:[%s861 + $0x20] sm:$0xff]
  %v1422 = vld [vmem:[%s861 + $0x28] sm:$0xff]
  %v1423 = vld [vmem:[%s861 + $0x30] sm:$0xff]
  %1431 = vrot.lane.b32.xlu0 %v1417, 1
  %v1432 = vpop.permute.xlu0 %1431
  %1433 = vrot.lane.b32.xlu0 %v1418, 1
  %v1434 = vpop.permute.xlu0 %1433
  %1435 = vrot.lane.b32.xlu0 %v1419, 1
  %v1436 = vpop.permute.xlu0 %1435
  %1437 = vrot.lane.b32.xlu0 %v1420, 1
  %v1438 = vpop.permute.xlu0 %1437
  %1439 = vrot.lane.b32.xlu0 %v1421, 1
  %v1440 = vpop.permute.xlu0 %1439
  %1441 = vrot.lane.b32.xlu0 %v1422, 1
  %v1442 = vpop.permute.xlu0 %1441
  %1443 = vrot.lane.b32.xlu0 %v1423, 1
  %v1444 = vpop.permute.xlu0 %1443
  %v1445 = vsel %vm1048, %v1432, %v1434
  %v1446 = vsel %vm1048, %v1434, %v1436
  %v1447 = vsel %vm1048, %v1436, %v1438
  %v1448 = vsel %vm1048, %v1438, %v1440
  %v1449 = vsel %vm1048, %v1440, %v1442
  %v1450 = vsel %vm1048, %v1442, %v1444
  %1457 = vst [vmem:[#allocation4 + $0x2a0] sm:$0xff] %v1445
  %1458 = vst [vmem:[#allocation4 + $0x2a8] sm:$0xff] %v1446
  %1459 = vst [vmem:[#allocation4 + $0x2b0] sm:$0xff] %v1447
  %1460 = vst [vmem:[#allocation4 + $0x2b8] sm:$0xff] %v1448
  %1461 = vst [vmem:[#allocation4 + $0x2c0] sm:$0xff] %v1449
  %1462 = vst [vmem:[#allocation4 + $0x2c8] sm:$0xff] %v1450
  %v1463 = vld [vmem:[%s861 + $0x8] sm:$0xff]
  %v1464 = vld [vmem:[%s861 + $0x10] sm:$0xff]
  %v1465 = vld [vmem:[%s861 + $0x18] sm:$0xff]
  %v1466 = vld [vmem:[%s861 + $0x20] sm:$0xff]
  %v1467 = vld [vmem:[%s861 + $0x28] sm:$0xff]
  %v1468 = vld [vmem:[%s861 + $0x30] sm:$0xff]
  %1469 = vst [vmem:[#allocation4 + $0x2d0] sm:$0xff] %v1463
  %1470 = vst [vmem:[#allocation4 + $0x2d8] sm:$0xff] %v1464
  %1471 = vst [vmem:[#allocation4 + $0x2e0] sm:$0xff] %v1465
  %1472 = vst [vmem:[#allocation4 + $0x2e8] sm:$0xff] %v1466
  %1473 = vst [vmem:[#allocation4 + $0x2f0] sm:$0xff] %v1467
  %1474 = vst [vmem:[#allocation4 + $0x2f8] sm:$0xff] %v1468
  %v1475 = vld [vmem:[%s4] sm:$0xff]
  %v1476 = vld [vmem:[%s4 + $0x8] sm:$0xff]
  %v1477 = vld [vmem:[%s4 + $0x10] sm:$0xff]
  %v1478 = vld [vmem:[%s4 + $0x18] sm:$0xff]
  %v1479 = vld [vmem:[#allocation4] sm:$0xff]
  %v1480 = vld [vmem:[#allocation4 + $0x8] sm:$0xff]
  %v1481 = vld [vmem:[#allocation4 + $0x10] sm:$0xff]
  %v1482 = vld [vmem:[#allocation4 + $0x18] sm:$0xff]
  %v1483 = vld [vmem:[#allocation4 + $0x20] sm:$0xff]
  %v1484 = vld [vmem:[#allocation4 + $0x28] sm:$0xff]
  %v1485 = vld [vmem:[#allocation4 + $0x30] sm:$0xff]
  %v1486 = vld [vmem:[#allocation4 + $0x38] sm:$0xff]
  %v1487 = vld [vmem:[#allocation4 + $0x40] sm:$0xff]
  %v1488 = vld [vmem:[#allocation4 + $0x48] sm:$0xff]
  %v1489 = vld [vmem:[#allocation4 + $0x50] sm:$0xff]
  %v1490 = vld [vmem:[#allocation4 + $0x58] sm:$0xff]
  %v1491 = vld [vmem:[#allocation4 + $0x60] sm:$0xff]
  %v1492 = vld [vmem:[#allocation4 + $0x68] sm:$0xff]
  %v1493 = vld [vmem:[#allocation4 + $0x70] sm:$0xff]
  %v1494 = vld [vmem:[#allocation4 + $0x78] sm:$0xff]
  %v1495 = vld [vmem:[#allocation4 + $0x80] sm:$0xff]
  %v1496 = vld [vmem:[#allocation4 + $0x88] sm:$0xff]
  %v1497 = vld [vmem:[#allocation4 + $0x90] sm:$0xff]
  %v1498 = vld [vmem:[#allocation4 + $0x98] sm:$0xff]
  %v1499 = vld [vmem:[#allocation4 + $0xa0] sm:$0xff]
  %v1500 = vld [vmem:[#allocation4 + $0xa8] sm:$0xff]
  %v1501 = vld [vmem:[#allocation4 + $0xb0] sm:$0xff]
  %v1502 = vld [vmem:[#allocation4 + $0xb8] sm:$0xff]
  %v1503 = vld [vmem:[#allocation4 + $0xc0] sm:$0xff]
  %v1504 = vld [vmem:[#allocation4 + $0xc8] sm:$0xff]
  %v1505 = vld [vmem:[#allocation4 + $0xd0] sm:$0xff]
  %v1506 = vld [vmem:[#allocation4 + $0xd8] sm:$0xff]
  %v1507 = vld [vmem:[#allocation4 + $0xe0] sm:$0xff]
  %v1508 = vld [vmem:[#allocation4 + $0xe8] sm:$0xff]
  %v1509 = vld [vmem:[#allocation4 + $0xf0] sm:$0xff]
  %v1510 = vld [vmem:[#allocation4 + $0xf8] sm:$0xff]
  %v1511 = vld [vmem:[#allocation4 + $0x100] sm:$0xff]
  %v1512 = vld [vmem:[#allocation4 + $0x108] sm:$0xff]
  %v1513 = vld [vmem:[#allocation4 + $0x110] sm:$0xff]
  %v1514 = vld [vmem:[#allocation4 + $0x118] sm:$0xff]
  %v1515 = vld [vmem:[#allocation4 + $0x120] sm:$0xff]
  %v1516 = vld [vmem:[#allocation4 + $0x128] sm:$0xff]
  %v1517 = vld [vmem:[#allocation4 + $0x130] sm:$0xff]
  %v1518 = vld [vmem:[#allocation4 + $0x138] sm:$0xff]
  %v1519 = vld [vmem:[#allocation4 + $0x140] sm:$0xff]
  %v1520 = vld [vmem:[#allocation4 + $0x148] sm:$0xff]
  %v1521 = vld [vmem:[#allocation4 + $0x150] sm:$0xff]
  %v1522 = vld [vmem:[#allocation4 + $0x158] sm:$0xff]
  %v1523 = vld [vmem:[#allocation4 + $0x160] sm:$0xff]
  %v1524 = vld [vmem:[#allocation4 + $0x168] sm:$0xff]
  %v1525 = vld [vmem:[#allocation4 + $0x170] sm:$0xff]
  %v1526 = vld [vmem:[#allocation4 + $0x178] sm:$0xff]
  %v1527 = vld [vmem:[#allocation4 + $0x180] sm:$0xff]
  %v1528 = vld [vmem:[#allocation4 + $0x188] sm:$0xff]
  %v1529 = vld [vmem:[#allocation4 + $0x190] sm:$0xff]
  %v1530 = vld [vmem:[#allocation4 + $0x198] sm:$0xff]
  %v1531 = vld [vmem:[#allocation4 + $0x1a0] sm:$0xff]
  %v1532 = vld [vmem:[#allocation4 + $0x1a8] sm:$0xff]
  %v1533 = vld [vmem:[#allocation4 + $0x1b0] sm:$0xff]
  %v1534 = vld [vmem:[#allocation4 + $0x1b8] sm:$0xff]
  %v1535 = vld [vmem:[#allocation4 + $0x1c0] sm:$0xff]
  %v1536 = vld [vmem:[#allocation4 + $0x1c8] sm:$0xff]
  %v1537 = vld [vmem:[#allocation4 + $0x1d0] sm:$0xff]
  %v1538 = vld [vmem:[#allocation4 + $0x1d8] sm:$0xff]
  %v1539 = vld [vmem:[#allocation4 + $0x1e0] sm:$0xff]
  %v1540 = vld [vmem:[#allocation4 + $0x1e8] sm:$0xff]
  %v1541 = vld [vmem:[#allocation4 + $0x1f0] sm:$0xff]
  %v1542 = vld [vmem:[#allocation4 + $0x1f8] sm:$0xff]
  %v1543 = vld [vmem:[#allocation4 + $0x200] sm:$0xff]
  %v1544 = vld [vmem:[#allocation4 + $0x208] sm:$0xff]
  %v1545 = vld [vmem:[#allocation4 + $0x210] sm:$0xff]
  %v1546 = vld [vmem:[#allocation4 + $0x218] sm:$0xff]
  %v1547 = vld [vmem:[#allocation4 + $0x220] sm:$0xff]
  %v1548 = vld [vmem:[#allocation4 + $0x228] sm:$0xff]
  %v1549 = vld [vmem:[#allocation4 + $0x230] sm:$0xff]
  %v1550 = vld [vmem:[#allocation4 + $0x238] sm:$0xff]
  %v1551 = vld [vmem:[#allocation4 + $0x240] sm:$0xff]
  %v1552 = vld [vmem:[#allocation4 + $0x248] sm:$0xff]
  %v1553 = vld [vmem:[#allocation4 + $0x250] sm:$0xff]
  %v1554 = vld [vmem:[#allocation4 + $0x258] sm:$0xff]
  %v1555 = vld [vmem:[#allocation4 + $0x260] sm:$0xff]
  %v1556 = vld [vmem:[#allocation4 + $0x268] sm:$0xff]
  %v1557 = vld [vmem:[#allocation4 + $0x270] sm:$0xff]
  %v1558 = vld [vmem:[#allocation4 + $0x278] sm:$0xff]
  %v1559 = vld [vmem:[#allocation4 + $0x280] sm:$0xff]
  %v1560 = vld [vmem:[#allocation4 + $0x288] sm:$0xff]
  %v1561 = vld [vmem:[#allocation4 + $0x290] sm:$0xff]
  %v1562 = vld [vmem:[#allocation4 + $0x298] sm:$0xff]
  %v1563 = vld [vmem:[#allocation4 + $0x2a0] sm:$0xff]
  %v1564 = vld [vmem:[#allocation4 + $0x2a8] sm:$0xff]
  %v1565 = vld [vmem:[#allocation4 + $0x2b0] sm:$0xff]
  %v1566 = vld [vmem:[#allocation4 + $0x2b8] sm:$0xff]
  %v1567 = vld [vmem:[#allocation4 + $0x2c0] sm:$0xff]
  %v1568 = vld [vmem:[#allocation4 + $0x2c8] sm:$0xff]
  %v1569 = vld [vmem:[#allocation4 + $0x2d0] sm:$0xff]
  %v1570 = vld [vmem:[#allocation4 + $0x2d8] sm:$0xff]
  %v1571 = vld [vmem:[#allocation4 + $0x2e0] sm:$0xff]
  %v1572 = vld [vmem:[#allocation4 + $0x2e8] sm:$0xff]
  %v1573 = vld [vmem:[#allocation4 + $0x2f0] sm:$0xff]
  %v1574 = vld [vmem:[#allocation4 + $0x2f8] sm:$0xff]
  %v1575 = vld [vmem:[%s5] sm:$0xff]
  %v1576 = vld [vmem:[%s5 + $0x8] sm:$0xff]
  %v1577 = vld [vmem:[%s5 + $0x10] sm:$0xff]
  %v1578 = vld [vmem:[%s5 + $0x18] sm:$0xff]
  %1580 = vset.pattern.permute.xlu0 0
  %1581 = vperm.xlu0 %1580, %v1575
  %v1582 = vpop.permute.xlu0 %1581
  %1585 = vset.pattern.permute.xlu0 0
  %1586 = vperm.xlu0 %1585, %v1576
  %v1587 = vpop.permute.xlu0 %1586
  %1590 = vset.pattern.permute.xlu0 0
  %1591 = vperm.xlu0 %1590, %v1577
  %v1592 = vpop.permute.xlu0 %1591
  %1595 = vset.pattern.permute.xlu0 0
  %1596 = vperm.xlu0 %1595, %v1578
  %v1597 = vpop.permute.xlu0 %1596
  %1599 = vmatprep.subr.mxu0 %v1480
  %1600 = vmatpush1.msra.mxu0 %v1479
  %1601 = vmatprep.subr.mxu0 %v1486
  %1602 = vmatpush1.msra.mxu0 %v1485
  %1603 = vmatprep.subr.mxu0 %v1492
  %1604 = vmatpush1.msra.mxu0 %v1491
  %1605 = vmatprep.subr.mxu0 %v1498
  %1606 = vmatpush1.msra.mxu0 %v1497
  %1607 = vmatprep.subr.mxu0 %v1504
  %1608 = vmatpush1.msra.mxu0 %v1503
  %1609 = vmatprep.subr.mxu0 %v1510
  %1610 = vmatpush1.msra.mxu0 %v1509
  %1611 = vmatprep.subr.mxu0 %v1516
  %1612 = vmatpush1.msra.mxu0 %v1515
  %1613 = vmatprep.subr.mxu0 %v1522
  %1614 = vmatpush1.msra.mxu0 %v1521
  %1615 = vmatprep.subr.mxu0 %v1528
  %1616 = vmatpush1.msra.mxu0 %v1527
  %1617 = vmatprep.subr.mxu0 %v1534
  %1618 = vmatpush1.msra.mxu0 %v1533
  %1619 = vmatprep.subr.mxu0 %v1540
  %1620 = vmatpush1.msra.mxu0 %v1539
  %1621 = vmatprep.subr.mxu0 %v1546
  %1622 = vmatpush1.msra.mxu0 %v1545
  %1623 = vmatprep.subr.mxu0 %v1552
  %1624 = vmatpush1.msra.mxu0 %v1551
  %1625 = vmatprep.subr.mxu0 %v1558
  %1626 = vmatpush1.msra.mxu0 %v1557
  %1627 = vmatprep.subr.mxu0 %v1564
  %1628 = vmatpush1.msra.mxu0 %v1563
  %1629 = vmatprep.subr.mxu0 %v1570
  %1630 = vmatpush1.msra.mxu0 %v1569
  %1631 = vmatprep.subr.mxu0 0.0
  %1632 = vmatpush1.msra.mxu0 0.0
  %1633 = vmatprep.subr.mxu0 0.0
  %1634 = vmatpush1.msra.mxu0 0.0
  %1635 = vmatprep.subr.mxu0 0.0
  %1636 = vmatpush1.msra.mxu0 0.0
  %1637 = vmatprep.subr.mxu0 0.0
  %1638 = vmatpush1.msra.mxu0 0.0
  %1639 = vmatprep.subr.mxu0 0.0
  %1640 = vmatpush1.msra.mxu0 0.0
  %1641 = vmatprep.subr.mxu0 0.0
  %1642 = vmatpush1.msra.mxu0 0.0
  %1643 = vmatprep.subr.mxu0 0.0
  %1644 = vmatpush1.msra.mxu0 0.0
  %1645 = vmatprep.subr.mxu0 0.0
  %1646 = vmatpush1.msra.mxu0 0.0
  %1647 = vmatprep.subr.mxu0 0.0
  %1648 = vmatpush1.msra.mxu0 0.0
  %1649 = vmatprep.subr.mxu0 0.0
  %1650 = vmatpush1.msra.mxu0 0.0
  %1651 = vmatprep.subr.mxu0 0.0
  %1652 = vmatpush1.msra.mxu0 0.0
  %1653 = vmatprep.subr.mxu0 0.0
  %1654 = vmatpush1.msra.mxu0 0.0
  %1655 = vmatprep.subr.mxu0 0.0
  %1656 = vmatpush1.msra.mxu0 0.0
  %1657 = vmatprep.subr.mxu0 0.0
  %1658 = vmatpush1.msra.mxu0 0.0
  %1659 = vmatprep.subr.mxu0 0.0
  %1660 = vmatpush1.msra.mxu0 0.0
  %1661 = vmatprep.subr.mxu0 0.0
  %1662 = vmatpush1.msra.mxu0 0.0
  %1663 = vmatprep.mubr.f32.mxu0 0.0
  %1664 = vmatmul.mubr.f32.gmra.mrb[0].mxu0 %v1475
  %v1665 = vpop.f32.mrb[0].mxu0
  %v1666 = vadd.f32 %v1582, %v1665
  %v1667 = vpop.f32.mrb[0].mxu0
  %v1668 = vadd.f32 %v1582, %v1667
  %1669 = vmatprep.mubr.f32.mxu0 0.0
  %1670 = vmatmul.mubr.f32.gmra.mrb[0].mxu0 %v1476
  %v1671 = vpop.f32.mrb[0].mxu0
  %v1672 = vadd.f32 %v1587, %v1671
  %v1673 = vpop.f32.mrb[0].mxu0
  %v1674 = vadd.f32 %v1587, %v1673
  %1675 = vmatprep.mubr.f32.mxu0 0.0
  %1676 = vmatmul.mubr.f32.gmra.mrb[0].mxu0 %v1477
  %v1677 = vpop.f32.mrb[0].mxu0
  %v1678 = vadd.f32 %v1592, %v1677
  %v1679 = vpop.f32.mrb[0].mxu0
  %v1680 = vadd.f32 %v1592, %v1679
  %1681 = vmatprep.mubr.f32.mxu0 0.0
  %1682 = vmatmul.mubr.f32.gmra.mrb[0].mxu0 %v1478
  %v1683 = vpop.f32.mrb[0].mxu0
  %v1684 = vadd.f32 %v1597, %v1683
  %v1685 = vpop.f32.mrb[0].mxu0
  %v1686 = vadd.f32 %v1597, %v1685
  %1687 = vdwg.mxu0
  %1688 = vmatprep.subr.mxu0 %v1482
  %1689 = vmatpush1.msra.mxu0 %v1481
  %1690 = vmatprep.subr.mxu0 %v1488
  %1691 = vmatpush1.msra.mxu0 %v1487
  %1692 = vmatprep.subr.mxu0 %v1494
  %1693 = vmatpush1.msra.mxu0 %v1493
  %1694 = vmatprep.subr.mxu0 %v1500
  %1695 = vmatpush1.msra.mxu0 %v1499
  %1696 = vmatprep.subr.mxu0 %v1506
  %1697 = vmatpush1.msra.mxu0 %v1505
  %1698 = vmatprep.subr.mxu0 %v1512
  %1699 = vmatpush1.msra.mxu0 %v1511
  %1700 = vmatprep.subr.mxu0 %v1518
  %1701 = vmatpush1.msra.mxu0 %v1517
  %1702 = vmatprep.subr.mxu0 %v1524
  %1703 = vmatpush1.msra.mxu0 %v1523
  %1704 = vmatprep.subr.mxu0 %v1530
  %1705 = vmatpush1.msra.mxu0 %v1529
  %1706 = vmatprep.subr.mxu0 %v1536
  %1707 = vmatpush1.msra.mxu0 %v1535
  %1708 = vmatprep.subr.mxu0 %v1542
  %1709 = vmatpush1.msra.mxu0 %v1541
  %1710 = vmatprep.subr.mxu0 %v1548
  %1711 = vmatpush1.msra.mxu0 %v1547
  %1712 = vmatprep.subr.mxu0 %v1554
  %1713 = vmatpush1.msra.mxu0 %v1553
  %1714 = vmatprep.subr.mxu0 %v1560
  %1715 = vmatpush1.msra.mxu0 %v1559
  %1716 = vmatprep.subr.mxu0 %v1566
  %1717 = vmatpush1.msra.mxu0 %v1565
  %1718 = vmatprep.subr.mxu0 %v1572
  %1719 = vmatpush1.msra.mxu0 %v1571
  %1720 = vmatprep.subr.mxu0 0.0
  %1721 = vmatpush1.msra.mxu0 0.0
  %1722 = vmatprep.subr.mxu0 0.0
  %1723 = vmatpush1.msra.mxu0 0.0
  %1724 = vmatprep.subr.mxu0 0.0
  %1725 = vmatpush1.msra.mxu0 0.0
  %1726 = vmatprep.subr.mxu0 0.0
  %1727 = vmatpush1.msra.mxu0 0.0
  %1728 = vmatprep.subr.mxu0 0.0
  %1729 = vmatpush1.msra.mxu0 0.0
  %1730 = vmatprep.subr.mxu0 0.0
  %1731 = vmatpush1.msra.mxu0 0.0
  %1732 = vmatprep.subr.mxu0 0.0
  %1733 = vmatpush1.msra.mxu0 0.0
  %1734 = vmatprep.subr.mxu0 0.0
  %1735 = vmatpush1.msra.mxu0 0.0
  %1736 = vmatprep.subr.mxu0 0.0
  %1737 = vmatpush1.msra.mxu0 0.0
  %1738 = vmatprep.subr.mxu0 0.0
  %1739 = vmatpush1.msra.mxu0 0.0
  %1740 = vmatprep.subr.mxu0 0.0
  %1741 = vmatpush1.msra.mxu0 0.0
  %1742 = vmatprep.subr.mxu0 0.0
  %1743 = vmatpush1.msra.mxu0 0.0
  %1744 = vmatprep.subr.mxu0 0.0
  %1745 = vmatpush1.msra.mxu0 0.0
  %1746 = vmatprep.subr.mxu0 0.0
  %1747 = vmatpush1.msra.mxu0 0.0
  %1748 = vmatprep.subr.mxu0 0.0
  %1749 = vmatpush1.msra.mxu0 0.0
  %1750 = vmatprep.subr.mxu0 0.0
  %1751 = vmatpush1.msra.mxu0 0.0
  %1752 = vmatprep.mubr.f32.mxu0 0.0
  %1753 = vmatmul.mubr.f32.gmra.mrb[0].mxu0 %v1475
  %v1754 = vpop.f32.mrb[0].mxu0
  %v1755 = vadd.f32 %v1582, %v1754
  %v1756 = vpop.f32.mrb[0].mxu0
  %v1757 = vadd.f32 %v1582, %v1756
  %1758 = vmatprep.mubr.f32.mxu0 0.0
  %1759 = vmatmul.mubr.f32.gmra.mrb[0].mxu0 %v1476
  %v1760 = vpop.f32.mrb[0].mxu0
  %v1761 = vadd.f32 %v1587, %v1760
  %v1762 = vpop.f32.mrb[0].mxu0
  %v1763 = vadd.f32 %v1587, %v1762
  %1764 = vmatprep.mubr.f32.mxu0 0.0
  %1765 = vmatmul.mubr.f32.gmra.mrb[0].mxu0 %v1477
  %v1766 = vpop.f32.mrb[0].mxu0
  %v1767 = vadd.f32 %v1592, %v1766
  %v1768 = vpop.f32.mrb[0].mxu0
  %v1769 = vadd.f32 %v1592, %v1768
  %1770 = vmatprep.mubr.f32.mxu0 0.0
  %1771 = vmatmul.mubr.f32.gmra.mrb[0].mxu0 %v1478
  %v1772 = vpop.f32.mrb[0].mxu0
  %v1773 = vadd.f32 %v1597, %v1772
  %v1774 = vpop.f32.mrb[0].mxu0
  %v1775 = vadd.f32 %v1597, %v1774
  %1776 = vdwg.mxu0
  %1777 = vmatprep.subr.mxu0 %v1484
  %1778 = vmatpush1.msra.mxu0 %v1483
  %1779 = vmatprep.subr.mxu0 %v1490
  %1780 = vmatpush1.msra.mxu0 %v1489
  %1781 = vmatprep.subr.mxu0 %v1496
  %1782 = vmatpush1.msra.mxu0 %v1495
  %1783 = vmatprep.subr.mxu0 %v1502
  %1784 = vmatpush1.msra.mxu0 %v1501
  %1785 = vmatprep.subr.mxu0 %v1508
  %1786 = vmatpush1.msra.mxu0 %v1507
  %1787 = vmatprep.subr.mxu0 %v1514
  %1788 = vmatpush1.msra.mxu0 %v1513
  %1789 = vmatprep.subr.mxu0 %v1520
  %1790 = vmatpush1.msra.mxu0 %v1519
  %1791 = vmatprep.subr.mxu0 %v1526
  %1792 = vmatpush1.msra.mxu0 %v1525
  %1793 = vmatprep.subr.mxu0 %v1532
  %1794 = vmatpush1.msra.mxu0 %v1531
  %1795 = vmatprep.subr.mxu0 %v1538
  %1796 = vmatpush1.msra.mxu0 %v1537
  %1797 = vmatprep.subr.mxu0 %v1544
  %1798 = vmatpush1.msra.mxu0 %v1543
  %1799 = vmatprep.subr.mxu0 %v1550
  %1800 = vmatpush1.msra.mxu0 %v1549
  %1801 = vmatprep.subr.mxu0 %v1556
  %1802 = vmatpush1.msra.mxu0 %v1555
  %1803 = vmatprep.subr.mxu0 %v1562
  %1804 = vmatpush1.msra.mxu0 %v1561
  %1805 = vmatprep.subr.mxu0 %v1568
  %1806 = vmatpush1.msra.mxu0 %v1567
  %1807 = vmatprep.subr.mxu0 %v1574
  %1808 = vmatpush1.msra.mxu0 %v1573
  %1809 = vmatprep.subr.mxu0 0.0
  %1810 = vmatpush1.msra.mxu0 0.0
  %1811 = vmatprep.subr.mxu0 0.0
  %1812 = vmatpush1.msra.mxu0 0.0
  %1813 = vmatprep.subr.mxu0 0.0
  %1814 = vmatpush1.msra.mxu0 0.0
  %1815 = vmatprep.subr.mxu0 0.0
  %1816 = vmatpush1.msra.mxu0 0.0
  %1817 = vmatprep.subr.mxu0 0.0
  %1818 = vmatpush1.msra.mxu0 0.0
  %1819 = vmatprep.subr.mxu0 0.0
  %1820 = vmatpush1.msra.mxu0 0.0
  %1821 = vmatprep.subr.mxu0 0.0
  %1822 = vmatpush1.msra.mxu0 0.0
  %1823 = vmatprep.subr.mxu0 0.0
  %1824 = vmatpush1.msra.mxu0 0.0
  %1825 = vmatprep.subr.mxu0 0.0
  %1826 = vmatpush1.msra.mxu0 0.0
  %1827 = vmatprep.subr.mxu0 0.0
  %1828 = vmatpush1.msra.mxu0 0.0
  %1829 = vmatprep.subr.mxu0 0.0
  %1830 = vmatpush1.msra.mxu0 0.0
  %1831 = vmatprep.subr.mxu0 0.0
  %1832 = vmatpush1.msra.mxu0 0.0
  %1833 = vmatprep.subr.mxu0 0.0
  %1834 = vmatpush1.msra.mxu0 0.0
  %1835 = vmatprep.subr.mxu0 0.0
  %1836 = vmatpush1.msra.mxu0 0.0
  %1837 = vmatprep.subr.mxu0 0.0
  %1838 = vmatpush1.msra.mxu0 0.0
  %1839 = vmatprep.subr.mxu0 0.0
  %1840 = vmatpush1.msra.mxu0 0.0
  %1841 = vmatprep.mubr.f32.mxu0 0.0
  %1842 = vmatmul.mubr.f32.gmra.mrb[0].mxu0 %v1475
  %v1843 = vpop.f32.mrb[0].mxu0
  %v1844 = vadd.f32 %v1582, %v1843
  %v1845 = vpop.f32.mrb[0].mxu0
  %v1846 = vadd.f32 %v1582, %v1845
  %1847 = vmatprep.mubr.f32.mxu0 0.0
  %1848 = vmatmul.mubr.f32.gmra.mrb[0].mxu0 %v1476
  %v1849 = vpop.f32.mrb[0].mxu0
  %v1850 = vadd.f32 %v1587, %v1849
  %v1851 = vpop.f32.mrb[0].mxu0
  %v1852 = vadd.f32 %v1587, %v1851
  %1853 = vmatprep.mubr.f32.mxu0 0.0
  %1854 = vmatmul.mubr.f32.gmra.mrb[0].mxu0 %v1477
  %v1855 = vpop.f32.mrb[0].mxu0
  %v1856 = vadd.f32 %v1592, %v1855
  %v1857 = vpop.f32.mrb[0].mxu0
  %v1858 = vadd.f32 %v1592, %v1857
  %1859 = vmatprep.mubr.f32.mxu0 0.0
  %1860 = vmatmul.mubr.f32.gmra.mrb[0].mxu0 %v1478
  %v1861 = vpop.f32.mrb[0].mxu0
  %v1862 = vadd.f32 %v1597, %v1861
  %v1863 = vpop.f32.mrb[0].mxu0
  %v1864 = vadd.f32 %v1597, %v1863
  %1865 = vdwg.mxu0
  %v1866 = vmul.f32 %v1666, %v784
  %v1867 = vmul.f32 %v1668, %v788
  %v1868 = vmul.f32 %v1755, %v792
  %v1869 = vmul.f32 %v1757, %v796
  %v1870 = vmul.f32 %v1844, %v800
  %v1871 = vmul.f32 %v1846, %v804
  %v1872 = vmul.f32 %v1672, %v784
  %v1873 = vmul.f32 %v1674, %v788
  %v1874 = vmul.f32 %v1761, %v792
  %v1875 = vmul.f32 %v1763, %v796
  %v1876 = vmul.f32 %v1850, %v800
  %v1877 = vmul.f32 %v1852, %v804
  %v1878 = vmul.f32 %v1678, %v784
  %v1879 = vmul.f32 %v1680, %v788
  %v1880 = vmul.f32 %v1767, %v792
  %v1881 = vmul.f32 %v1769, %v796
  %v1882 = vmul.f32 %v1856, %v800
  %v1883 = vmul.f32 %v1858, %v804
  %v1884 = vmul.f32 %v1684, %v784
  %v1885 = vmul.f32 %v1686, %v788
  %v1886 = vmul.f32 %v1773, %v792
  %v1887 = vmul.f32 %v1775, %v796
  %v1888 = vmul.f32 %v1862, %v800
  %v1889 = vmul.f32 %v1864, %v804
  %v1890 = vadd.f32 %v1866, %v1867
  %v1891 = vadd.f32 %v1890, %v1868
  %v1892 = vadd.f32 %v1891, %v1869
  %v1893 = vadd.f32 %v1892, %v1870
  %v1894 = vadd.f32 %v1893, %v1871
  %1895 = vadd.xlane.f32.xlu0 %v1894
  %v1896 = vpop.xlane.xlu0 %1895
  %v1897 = vadd.f32 %v1872, %v1873
  %v1898 = vadd.f32 %v1897, %v1874
  %v1899 = vadd.f32 %v1898, %v1875
  %v1900 = vadd.f32 %v1899, %v1876
  %v1901 = vadd.f32 %v1900, %v1877
  %1902 = vadd.xlane.f32.xlu0 %v1901
  %v1903 = vpop.xlane.xlu0 %1902
  %v1904 = vadd.f32 %v1878, %v1879
  %v1905 = vadd.f32 %v1904, %v1880
  %v1906 = vadd.f32 %v1905, %v1881
  %v1907 = vadd.f32 %v1906, %v1882
  %v1908 = vadd.f32 %v1907, %v1883
  %1909 = vadd.xlane.f32.xlu0 %v1908
  %v1910 = vpop.xlane.xlu0 %1909
  %v1911 = vadd.f32 %v1884, %v1885
  %v1912 = vadd.f32 %v1911, %v1886
  %v1913 = vadd.f32 %v1912, %v1887
  %v1914 = vadd.f32 %v1913, %v1888
  %v1915 = vadd.f32 %v1914, %v1889
  %1916 = vadd.xlane.f32.xlu0 %v1915
  %v1917 = vpop.xlane.xlu0 %1916
  %v1918 = vmul.f32 %v1866, %v1866
  %v1919 = vmul.f32 %v1867, %v1867
  %v1920 = vmul.f32 %v1868, %v1868
  %v1921 = vmul.f32 %v1869, %v1869
  %v1922 = vmul.f32 %v1870, %v1870
  %v1923 = vmul.f32 %v1871, %v1871
  %v1924 = vmul.f32 %v1872, %v1872
  %v1925 = vmul.f32 %v1873, %v1873
  %v1926 = vmul.f32 %v1874, %v1874
  %v1927 = vmul.f32 %v1875, %v1875
  %v1928 = vmul.f32 %v1876, %v1876
  %v1929 = vmul.f32 %v1877, %v1877
  %v1930 = vmul.f32 %v1878, %v1878
  %v1931 = vmul.f32 %v1879, %v1879
  %v1932 = vmul.f32 %v1880, %v1880
  %v1933 = vmul.f32 %v1881, %v1881
  %v1934 = vmul.f32 %v1882, %v1882
  %v1935 = vmul.f32 %v1883, %v1883
  %v1936 = vmul.f32 %v1884, %v1884
  %v1937 = vmul.f32 %v1885, %v1885
  %v1938 = vmul.f32 %v1886, %v1886
  %v1939 = vmul.f32 %v1887, %v1887
  %v1940 = vmul.f32 %v1888, %v1888
  %v1941 = vmul.f32 %v1889, %v1889
  %v1942 = vadd.f32 %v1918, %v1919
  %v1943 = vadd.f32 %v1942, %v1920
  %v1944 = vadd.f32 %v1943, %v1921
  %v1945 = vadd.f32 %v1944, %v1922
  %v1946 = vadd.f32 %v1945, %v1923
  %1947 = vadd.xlane.f32.xlu0 %v1946
  %v1948 = vpop.xlane.xlu0 %1947
  %v1949 = vadd.f32 %v1924, %v1925
  %v1950 = vadd.f32 %v1949, %v1926
  %v1951 = vadd.f32 %v1950, %v1927
  %v1952 = vadd.f32 %v1951, %v1928
  %v1953 = vadd.f32 %v1952, %v1929
  %1954 = vadd.xlane.f32.xlu0 %v1953
  %v1955 = vpop.xlane.xlu0 %1954
  %v1956 = vadd.f32 %v1930, %v1931
  %v1957 = vadd.f32 %v1956, %v1932
  %v1958 = vadd.f32 %v1957, %v1933
  %v1959 = vadd.f32 %v1958, %v1934
  %v1960 = vadd.f32 %v1959, %v1935
  %1961 = vadd.xlane.f32.xlu0 %v1960
  %v1962 = vpop.xlane.xlu0 %1961
  %v1963 = vadd.f32 %v1936, %v1937
  %v1964 = vadd.f32 %v1963, %v1938
  %v1965 = vadd.f32 %v1964, %v1939
  %v1966 = vadd.f32 %v1965, %v1940
  %v1967 = vadd.f32 %v1966, %v1941
  %1968 = vadd.xlane.f32.xlu0 %v1967
  %v1969 = vpop.xlane.xlu0 %1968
  %v1970 = vadd.f32 %v1896, %v1903
  %v1971 = vadd.f32 %v1970, %v1910
  %v1972 = vadd.f32 %v1971, %v1917
  %v1973 = vadd.f32 %v1948, %v1955
  %v1974 = vadd.f32 %v1973, %v1962
  %v1975 = vadd.f32 %v1974, %v1969
  %v1976 = vmul.f32 %v1972, 0.00048828125
  %v1977 = vmul.f32 %v1975, 0.00048828125
  %v1978 = vmul.f32 %v1976, %v1976
  %v1979 = vsub.f32 %v1977, %v1978
  %v1980 = vld [vmem:[%s6] sm:$0xff]
  %v1981 = vadd.f32 %v1979, 1e-05
  %v1982 = vrsqrt.pop %v1981
  %v1983 = vmul.f32 %v1980, %v1982
  %v1984 = vld [vmem:[%s7] sm:$0xff]
  %v1985 = vmul.f32 %v1976, %v1983
  %v1986 = vsub.f32 %v1984, %v1985
  %1988 = vset.pattern.permute.xlu0 0
  %1989 = vperm.xlu0 %1988, %v1983
  %v1990 = vpop.permute.xlu0 %1989
  %v1992 = vmul.f32 %v1666, %v1990
  %v1993 = vmul.f32 %v1668, %v1990
  %v1994 = vmul.f32 %v1755, %v1990
  %v1995 = vmul.f32 %v1757, %v1990
  %v1996 = vmul.f32 %v1844, %v1990
  %v1997 = vmul.f32 %v1846, %v1990
  %1999 = vset.pattern.permute.xlu0 0
  %2000 = vperm.xlu0 %1999, %v1986
  %v2001 = vpop.permute.xlu0 %2000
  %v2003 = vadd.f32 %v1992, %v2001
  %v2004 = vadd.f32 %v1993, %v2001
  %v2005 = vadd.f32 %v1994, %v2001
  %v2006 = vadd.f32 %v1995, %v2001
  %v2007 = vadd.f32 %v1996, %v2001
  %v2008 = vadd.f32 %v1997, %v2001
  %vm2009 = vcmp.ge.f32.partialorder %v2003, 0.0
  %vm2010 = vcmp.ge.f32.partialorder %v2004, 0.0
  %vm2011 = vcmp.ge.f32.partialorder %v2005, 0.0
  %vm2012 = vcmp.ge.f32.partialorder %v2006, 0.0
  %vm2013 = vcmp.ge.f32.partialorder %v2007, 0.0
  %vm2014 = vcmp.ge.f32.partialorder %v2008, 0.0
  %v2015 = vmul.f32 %v2003, 0.01
  %v2016 = vmul.f32 %v2004, 0.01
  %v2017 = vmul.f32 %v2005, 0.01
  %v2018 = vmul.f32 %v2006, 0.01
  %v2019 = vmul.f32 %v2007, 0.01
  %v2020 = vmul.f32 %v2008, 0.01
  %v2021 = vsel %vm2009, %v2003, %v2015
  %v2022 = vsel %vm2010, %v2004, %v2016
  %v2023 = vsel %vm2011, %v2005, %v2017
  %v2024 = vsel %vm2012, %v2006, %v2018
  %v2025 = vsel %vm2013, %v2007, %v2019
  %v2026 = vsel %vm2014, %v2008, %v2020
  %2027 = vst [vmem:[%s8] sm:$0xff] %v2021
  %2028 = vst [vmem:[%s8 + $0x8] sm:$0xff] %v2022
  %2029 = vst [vmem:[%s8 + $0x10] sm:$0xff] %v2023
  %2030 = vst [vmem:[%s8 + $0x18] sm:$0xff] %v2024
  %2031 = vst [vmem:[%s8 + $0x20] sm:$0xff] %v2025
  %2032 = vst [vmem:[%s8 + $0x28] sm:$0xff] %v2026
  %v2033 = vmul.f32 %v1672, %v1990
  %v2034 = vmul.f32 %v1674, %v1990
  %v2035 = vmul.f32 %v1761, %v1990
  %v2036 = vmul.f32 %v1763, %v1990
  %v2037 = vmul.f32 %v1850, %v1990
  %v2038 = vmul.f32 %v1852, %v1990
  %v2039 = vadd.f32 %v2033, %v2001
  %v2040 = vadd.f32 %v2034, %v2001
  %v2041 = vadd.f32 %v2035, %v2001
  %v2042 = vadd.f32 %v2036, %v2001
  %v2043 = vadd.f32 %v2037, %v2001
  %v2044 = vadd.f32 %v2038, %v2001
  %vm2045 = vcmp.ge.f32.partialorder %v2039, 0.0
  %vm2046 = vcmp.ge.f32.partialorder %v2040, 0.0
  %vm2047 = vcmp.ge.f32.partialorder %v2041, 0.0
  %vm2048 = vcmp.ge.f32.partialorder %v2042, 0.0
  %vm2049 = vcmp.ge.f32.partialorder %v2043, 0.0
  %vm2050 = vcmp.ge.f32.partialorder %v2044, 0.0
  %v2051 = vmul.f32 %v2039, 0.01
  %v2052 = vmul.f32 %v2040, 0.01
  %v2053 = vmul.f32 %v2041, 0.01
  %v2054 = vmul.f32 %v2042, 0.01
  %v2055 = vmul.f32 %v2043, 0.01
  %v2056 = vmul.f32 %v2044, 0.01
  %v2057 = vsel %vm2045, %v2039, %v2051
  %v2058 = vsel %vm2046, %v2040, %v2052
  %v2059 = vsel %vm2047, %v2041, %v2053
  %v2060 = vsel %vm2048, %v2042, %v2054
  %v2061 = vsel %vm2049, %v2043, %v2055
  %v2062 = vsel %vm2050, %v2044, %v2056
  %2063 = vst [vmem:[%s8 + $0x30] sm:$0xff] %v2057
  %2064 = vst [vmem:[%s8 + $0x38] sm:$0xff] %v2058
  %2065 = vst [vmem:[%s8 + $0x40] sm:$0xff] %v2059
  %2066 = vst [vmem:[%s8 + $0x48] sm:$0xff] %v2060
  %2067 = vst [vmem:[%s8 + $0x50] sm:$0xff] %v2061
  %2068 = vst [vmem:[%s8 + $0x58] sm:$0xff] %v2062
  %v2069 = vmul.f32 %v1678, %v1990
  %v2070 = vmul.f32 %v1680, %v1990
  %v2071 = vmul.f32 %v1767, %v1990
  %v2072 = vmul.f32 %v1769, %v1990
  %v2073 = vmul.f32 %v1856, %v1990
  %v2074 = vmul.f32 %v1858, %v1990
  %v2075 = vadd.f32 %v2069, %v2001
  %v2076 = vadd.f32 %v2070, %v2001
  %v2077 = vadd.f32 %v2071, %v2001
  %v2078 = vadd.f32 %v2072, %v2001
  %v2079 = vadd.f32 %v2073, %v2001
  %v2080 = vadd.f32 %v2074, %v2001
  %vm2081 = vcmp.ge.f32.partialorder %v2075, 0.0
  %vm2082 = vcmp.ge.f32.partialorder %v2076, 0.0
  %vm2083 = vcmp.ge.f32.partialorder %v2077, 0.0
  %vm2084 = vcmp.ge.f32.partialorder %v2078, 0.0
  %vm2085 = vcmp.ge.f32.partialorder %v2079, 0.0
  %vm2086 = vcmp.ge.f32.partialorder %v2080, 0.0
  %v2087 = vmul.f32 %v2075, 0.01
  %v2088 = vmul.f32 %v2076, 0.01
  %v2089 = vmul.f32 %v2077, 0.01
  %v2090 = vmul.f32 %v2078, 0.01
  %v2091 = vmul.f32 %v2079, 0.01
  %v2092 = vmul.f32 %v2080, 0.01
  %v2093 = vsel %vm2081, %v2075, %v2087
  %v2094 = vsel %vm2082, %v2076, %v2088
  %v2095 = vsel %vm2083, %v2077, %v2089
  %v2096 = vsel %vm2084, %v2078, %v2090
  %v2097 = vsel %vm2085, %v2079, %v2091
  %v2098 = vsel %vm2086, %v2080, %v2092
  %2099 = vst [vmem:[%s8 + $0x60] sm:$0xff] %v2093
  %2100 = vst [vmem:[%s8 + $0x68] sm:$0xff] %v2094
  %2101 = vst [vmem:[%s8 + $0x70] sm:$0xff] %v2095
  %2102 = vst [vmem:[%s8 + $0x78] sm:$0xff] %v2096
  %2103 = vst [vmem:[%s8 + $0x80] sm:$0xff] %v2097
  %2104 = vst [vmem:[%s8 + $0x88] sm:$0xff] %v2098
  %v2105 = vmul.f32 %v1684, %v1990
  %v2106 = vmul.f32 %v1686, %v1990
  %v2107 = vmul.f32 %v1773, %v1990
  %v2108 = vmul.f32 %v1775, %v1990
  %v2109 = vmul.f32 %v1862, %v1990
  %v2110 = vmul.f32 %v1864, %v1990
  %v2111 = vadd.f32 %v2105, %v2001
  %v2112 = vadd.f32 %v2106, %v2001
  %v2113 = vadd.f32 %v2107, %v2001
  %v2114 = vadd.f32 %v2108, %v2001
  %v2115 = vadd.f32 %v2109, %v2001
  %v2116 = vadd.f32 %v2110, %v2001
  %vm2117 = vcmp.ge.f32.partialorder %v2111, 0.0
  %vm2118 = vcmp.ge.f32.partialorder %v2112, 0.0
  %vm2119 = vcmp.ge.f32.partialorder %v2113, 0.0
  %vm2120 = vcmp.ge.f32.partialorder %v2114, 0.0
  %vm2121 = vcmp.ge.f32.partialorder %v2115, 0.0
  %vm2122 = vcmp.ge.f32.partialorder %v2116, 0.0
  %v2123 = vmul.f32 %v2111, 0.01
  %v2124 = vmul.f32 %v2112, 0.01
  %v2125 = vmul.f32 %v2113, 0.01
  %v2126 = vmul.f32 %v2114, 0.01
  %v2127 = vmul.f32 %v2115, 0.01
  %v2128 = vmul.f32 %v2116, 0.01
  %v2129 = vsel %vm2117, %v2111, %v2123
  %v2130 = vsel %vm2118, %v2112, %v2124
  %v2131 = vsel %vm2119, %v2113, %v2125
  %v2132 = vsel %vm2120, %v2114, %v2126
  %v2133 = vsel %vm2121, %v2115, %v2127
  %v2134 = vsel %vm2122, %v2116, %v2128
  %2135 = vst [vmem:[%s8 + $0x90] sm:$0xff] %v2129
  %2136 = vst [vmem:[%s8 + $0x98] sm:$0xff] %v2130
  %2137 = vst [vmem:[%s8 + $0xa0] sm:$0xff] %v2131
  %2138 = vst [vmem:[%s8 + $0xa8] sm:$0xff] %v2132
  %2139 = vst [vmem:[%s8 + $0xb0] sm:$0xff] %v2133
  %2140 = vst [vmem:[%s8 + $0xb8] sm:$0xff] %v2134
  // Predicated region
  $region34: #{forward.1} parent=0 // pred_check
    _
  $region35: #{forward.1} parent=0 // pred_check_branch
    %2142 = sbr.rel (0) target = $region37
  $region36: #{forward.1} parent=0 // pred_region
    _
  $region37: #{forward.1} parent=0 // pred_fallthru
    _
  // Predicated region
  $region38: #{forward.1} parent=0 // pred_check
    _
  $region39: #{forward.1} parent=0 // pred_check_branch
    %2144 = sbr.rel (0) target = $region41
  $region40: #{forward.1} parent=0 // pred_region
    _
  $region41: #{forward.1} parent=0 // pred_fallthru
    _

</llo_original>
